<compile_context>
chip_gen: v7x
topology: tpu7x:2x2x1
jax: 0.10.0
libtpu: 0.0.40
codegen_flags: <defaults>
</compile_context>

<pallas_src>
import functools

import jax
import jax.numpy as jnp
from jax.experimental import pallas as pl
from jax.experimental.pallas import tpu as pltpu

LANE = 128                       # vreg lane width / MXU edge
TILE_M = 128                     # output row tile
VMEM_LIMIT = 32 * 1024 * 1024    # explicit scoped-VMEM budget (safe on v7x)


def _round_up(n, m):
    return ((n + m - 1) // m) * m


# ---------------------------------------------------------------------------
# Fused kernel
# ---------------------------------------------------------------------------
def _fused_sgc_kernel(x_ref, w1t_ref, a1_ref, w2t_ref, a2_ref, o_ref,
                      g1_ref, *, num_classes):
    """Fused 2-layer SGC forward.

    program_id(0)==0 : g1 = (A1 @ (x @ W1^T)) @ W2^T  -> persistent VMEM scratch
    every step       : out_tile = log_softmax(A2_tile @ g1) with padded class
                       lanes masked out of the reduction.
    """
    @pl.when(pl.program_id(0) == 0)
    def _compute_g1():
        xw = jnp.dot(x_ref[...], w1t_ref[...],
                     preferred_element_type=jnp.float32).astype(x_ref.dtype)
        h1 = jnp.dot(a1_ref[...], xw,
                     preferred_element_type=jnp.float32).astype(x_ref.dtype)
        g1_ref[...] = jnp.dot(h1, w2t_ref[...],
                              preferred_element_type=jnp.float32
                              ).astype(g1_ref.dtype)

    h2 = jnp.dot(a2_ref[...], g1_ref[...],
                 preferred_element_type=jnp.float32)
    lane = jax.lax.broadcasted_iota(jnp.int32, h2.shape, 1)
    h2 = jnp.where(lane < num_classes, h2, jnp.float32(-1e30))
    m = jnp.max(h2, axis=1, keepdims=True)
    s = h2 - m
    lse = jnp.log(jnp.sum(jnp.exp(s), axis=1, keepdims=True))
    o_ref[...] = (s - lse).astype(o_ref.dtype)


# ---------------------------------------------------------------------------
# Forward pass wrapper
# ---------------------------------------------------------------------------
def sgc_forward(x, a1_p, w1t, a2_p, w2t, n_tgt2, *,
                compute_dtype=jnp.bfloat16):
    """log_softmax((A2 @ ((A1 @ x) @ W1^T)) @ W2^T), eval mode.

    a1_p / a2_p must already be zero-padded to (128-multiple, 128-multiple)
    shapes in `compute_dtype` (see dense_adj_padded).
    """
    n_src0, num_feats = x.shape
    hidden = w1t.shape[1]
    num_classes = w2t.shape[1]

    np1, np0 = a1_p.shape
    np2, np1b = a2_p.shape
    assert np1b == np1, "A2's source dim must match A1's target dim (padded)"
    assert np0 >= n_src0 and np0 % TILE_M == 0
    assert np1 % TILE_M == 0 and np2 % TILE_M == 0

    fp = _round_up(num_feats, LANE)
    hp = _round_up(hidden, LANE)
    cp = _round_up(num_classes, LANE)

    cd = compute_dtype
    isz = lambda d: jnp.dtype(d).itemsize

    x_p = jnp.pad(x, ((0, np0 - n_src0), (0, fp - num_feats))).astype(cd)
    w1t_p = jnp.pad(w1t, ((0, fp - num_feats), (0, hp - hidden))).astype(cd)
    w2t_p = jnp.pad(w2t, ((0, hp - hidden), (0, cp - num_classes))).astype(cd)

    tile_m = min(TILE_M, np2)
    grid = (np2 // tile_m,)

    # VMEM budget check: resident inputs + double-buffered A2 tile / out tile
    # + persistent g1 scratch + f32 temps for the one-shot g1 computation.
    resident = (x_p.size + w1t_p.size + w2t_p.size + a1_p.size) * isz(cd)
    per_step = 2 * (tile_m * np1 * isz(cd) + tile_m * cp * 4)
    scratch = np1 * cp * isz(cd) + (np0 * hp + np1 * hp) * 4
    # TODO(synk): if this ever trips (very large subgraphs), fall back to a
    # K-tiled multi-call path instead of the fully-resident fused kernel.
    assert resident + per_step + scratch < VMEM_LIMIT, "fused working set > VMEM"

    cost = pl.CostEstimate(
        flops=2 * (np0 * fp * hp + np1 * np0 * hp
                   + np1 * hp * cp + np2 * np1 * cp),
        transcendentals=np2 * cp + np2,
        bytes_accessed=(x_p.size + w1t_p.size + w2t_p.size
                        + a1_p.size + a2_p.size) * isz(cd) + np2 * cp * 4)

    out_p = pl.pallas_call(
        functools.partial(_fused_sgc_kernel, num_classes=num_classes),
        out_shape=jax.ShapeDtypeStruct((np2, cp), jnp.float32),
        grid_spec=pltpu.PrefetchScalarGridSpec(
            num_scalar_prefetch=0,
            grid=grid,
            in_specs=[
                pl.BlockSpec((np0, fp), lambda i: (0, 0)),      # x     (resident)
                pl.BlockSpec((fp, hp), lambda i: (0, 0)),       # W1^T  (resident)
                pl.BlockSpec((np1, np0), lambda i: (0, 0)),     # A1    (resident)
                pl.BlockSpec((hp, cp), lambda i: (0, 0)),       # W2^T  (resident)
                pl.BlockSpec((tile_m, np1), lambda i: (i, 0)),  # A2 row tile
            ],
            out_specs=pl.BlockSpec((tile_m, cp), lambda i: (i, 0)),
            scratch_shapes=[pltpu.VMEM((np1, cp), cd)],         # persistent g1
        ),
        compiler_params=pltpu.CompilerParams(
            # "arbitrary": the g1 scratch is computed once at step 0 and reused
            # sequentially across row tiles (a parallel axis would break this
            # on v7x megacore).
            dimension_semantics=("arbitrary",),
            vmem_limit_bytes=VMEM_LIMIT),
        cost_estimate=cost,
    )(x_p, w1t_p, a1_p, w2t_p, a2_p)

    # TODO(synk): F.dropout(p=0.5) between layers is identity in eval mode;
    # training-mode dropout is not implemented.
    return out_p[:n_tgt2, :num_classes]


# ---------------------------------------------------------------------------
# Plain-JAX glue
# ---------------------------------------------------------------------------
def dense_adj_padded(edge_index, edge_weight, np_tgt, np_src, dtype):
    """Edge list -> dense adjacency, built DIRECTLY at padded shape.

    Scatter-add accumulates in f32 (robust to duplicate edges), single cast to
    the compute dtype; no separate pad pass over the O(N^2) array.
    """
    src, dst = edge_index[0], edge_index[1]
    a = jnp.zeros((np_tgt, np_src), jnp.float32)
    a = a.at[dst, src].add(edge_weight)
    return a.astype(dtype)


def glorot(key, shape):
    fan_in, fan_out = shape[1], shape[0]
    limit = (6.0 / (fan_in + fan_out)) ** 0.5
    return jax.random.uniform(key, shape, jnp.float32, -limit, limit)


if __name__ == "__main__":
    key = jax.random.PRNGKey(0)
    k_x, k_w1, k_w2, k_e1, k_e2, k_ew = jax.random.split(key, 6)

    # Small but multi-tile shapes (NeighborSampler-style bipartite hops).
    num_feats, hidden, num_classes = 96, 16, 10
    n_src0, n_tgt1, n_tgt2 = 400, 250, 120

    np0 = _round_up(n_src0, TILE_M)   # 512
    np1 = _round_up(n_tgt1, TILE_M)   # 384
    np2 = _round_up(n_tgt2, TILE_M)   # 128

    # Node features.
    x = jax.random.normal(k_x, (n_src0, num_feats), jnp.float32)

    # Parameters (PyTorch Linear weight [out, in], bias=False); kernel takes W^T.
    w1 = glorot(k_w1, (hidden, num_feats))
    w2 = glorot(k_w2, (num_classes, hidden))

    # Synthetic bipartite edge lists, self-loops for target nodes included.
    n_rand_e1, n_rand_e2 = 2000, 800
    src1 = jax.random.randint(k_e1, (n_rand_e1,), 0, n_src0)
    dst1 = jax.random.randint(jax.random.fold_in(k_e1, 1), (n_rand_e1,), 0, n_tgt1)
    src1 = jnp.concatenate([src1, jnp.arange(n_tgt1)])
    dst1 = jnp.concatenate([dst1, jnp.arange(n_tgt1)])
    edge_index1 = jnp.stack([src1, dst1])

    src2 = jax.random.randint(k_e2, (n_rand_e2,), 0, n_tgt1)
    dst2 = jax.random.randint(jax.random.fold_in(k_e2, 1), (n_rand_e2,), 0, n_tgt2)
    src2 = jnp.concatenate([src2, jnp.arange(n_tgt2)])
    dst2 = jnp.concatenate([dst2, jnp.arange(n_tgt2)])
    edge_index2 = jnp.stack([src2, dst2])

    # Global edge_weight vector + e_id indexing (as in forward: edge_weight[e_id]).
    n_e1 = edge_index1.shape[1]
    n_e2 = edge_index2.shape[1]
    edge_weight_all = jax.random.uniform(k_ew, (n_e1 + n_e2,), jnp.float32, 0.1, 1.0)
    e_id1 = jnp.arange(n_e1)
    e_id2 = jnp.arange(n_e1, n_e1 + n_e2)

    # Dense adjacency glue (scatter-add over edges), built padded in bf16.
    cd = jnp.bfloat16
    a1_p = dense_adj_padded(edge_index1, edge_weight_all[e_id1], np1, np0, cd)
    a2_p = dense_adj_padded(edge_index2, edge_weight_all[e_id2], np2, np1, cd)

    out = sgc_forward(x, a1_p, w1.T, a2_p, w2.T, n_tgt2)
    out = jax.block_until_ready(out)

    # Reference with matching bf16-operand / f32-accumulate precision.
    a1_d = a1_p[:n_tgt1, :n_src0]
    a2_d = a2_p[:n_tgt2, :n_tgt1]
    xw_r = jnp.dot(x.astype(cd), w1.T.astype(cd),
                   preferred_element_type=jnp.float32).astype(cd)
    h1_r = jnp.dot(a1_d, xw_r, preferred_element_type=jnp.float32).astype(cd)
    g1_r = jnp.dot(h1_r, w2.T.astype(cd),
                   preferred_element_type=jnp.float32).astype(cd)
    h2_r = jnp.dot(a2_d, g1_r, preferred_element_type=jnp.float32)
    ref = jax.nn.log_softmax(h2_r, axis=1)

    assert out.shape == (n_tgt2, num_classes)
    assert bool(jnp.all(jnp.isfinite(out)))
    max_err = float(jnp.max(jnp.abs(out - ref)))
    assert jnp.allclose(out, ref, atol=2e-3, rtol=2e-3), max_err

    print("KERNEL_OK")
</pallas_src>

<mosaic_0001>
module attributes {stable_mosaic.version = 11 : i64} {
  func.func @_fused_sgc_kernel(%arg0: i32, %arg1: memref<512x128xbf16, #tpu.memory_space<vmem>>, %arg2: memref<128x128xbf16, #tpu.memory_space<vmem>>, %arg3: memref<256x512xbf16, #tpu.memory_space<vmem>>, %arg4: memref<128x128xbf16, #tpu.memory_space<vmem>>, %arg5: memref<128x256xbf16, #tpu.memory_space<vmem>>, %arg6: memref<128x128xf32, #tpu.memory_space<vmem>>, %arg7: memref<256x128xbf16, #tpu.memory_space<vmem>>) attributes {dimension_semantics = [#tpu.dimension_semantics<arbitrary>], iteration_bounds = array<i64: 1>, scalar_prefetch = 0 : i64, scratch_operands = 1 : i64, tpu.core_type = #tpu.core_type<tc>, window_params = [{pipeline_mode = #tpu.pipeline_mode<synchronous>, transform_indices = @transform_0, window_bounds = array<i64: 512, 128>}, {pipeline_mode = #tpu.pipeline_mode<synchronous>, transform_indices = @transform_1, window_bounds = array<i64: 128, 128>}, {pipeline_mode = #tpu.pipeline_mode<synchronous>, transform_indices = @transform_2, window_bounds = array<i64: 256, 512>}, {pipeline_mode = #tpu.pipeline_mode<synchronous>, transform_indices = @transform_3, window_bounds = array<i64: 128, 128>}, {transform_indices = @transform_4, window_bounds = array<i64: 128, 256>}, {transform_indices = @transform_5, window_bounds = array<i64: 128, 128>}]} {
    %c0_i32 = arith.constant 0 : i32
    %0 = arith.cmpi eq, %arg0, %c0_i32 : i32
    %1 = arith.extui %0 : i1 to i32
    %c0_i32_0 = arith.constant 0 : i32
    %2 = arith.cmpi ne, %1, %c0_i32_0 : i32
    scf.if %2 {
      %c0_9 = arith.constant 0 : index
      %c0_10 = arith.constant 0 : index
      %22 = vector.load %arg1[%c0_9, %c0_10] : memref<512x128xbf16, #tpu.memory_space<vmem>>, vector<512x128xbf16>
      %c0_11 = arith.constant 0 : index
      %c0_12 = arith.constant 0 : index
      %23 = vector.load %arg2[%c0_11, %c0_12] : memref<128x128xbf16, #tpu.memory_space<vmem>>, vector<128x128xbf16>
      %cst_13 = arith.constant dense<0.000000e+00> : vector<512x128xf32>
      %24 = tpu.matmul %22, %23, %cst_13 {dimension_numbers = #tpu.dot_dimension_numbers<[1], [0], [0], [1], [0, 0, 1, 1], [], []>} : vector<512x128xbf16>, vector<128x128xbf16>, vector<512x128xf32> -> vector<512x128xf32>
      %25 = arith.truncf %24 : vector<512x128xf32> to vector<512x128xbf16>
      %c0_14 = arith.constant 0 : index
      %c0_15 = arith.constant 0 : index
      %26 = vector.load %arg3[%c0_14, %c0_15] : memref<256x512xbf16, #tpu.memory_space<vmem>>, vector<256x512xbf16>
      %cst_16 = arith.constant dense<0.000000e+00> : vector<256x128xf32>
      %27 = tpu.matmul %26, %25, %cst_16 {dimension_numbers = #tpu.dot_dimension_numbers<[1], [0], [0], [1], [0, 0, 1, 1], [], []>} : vector<256x512xbf16>, vector<512x128xbf16>, vector<256x128xf32> -> vector<256x128xf32>
      %28 = arith.truncf %27 : vector<256x128xf32> to vector<256x128xbf16>
      %c0_17 = arith.constant 0 : index
      %c0_18 = arith.constant 0 : index
      %29 = vector.load %arg4[%c0_17, %c0_18] : memref<128x128xbf16, #tpu.memory_space<vmem>>, vector<128x128xbf16>
      %cst_19 = arith.constant dense<0.000000e+00> : vector<256x128xf32>
      %30 = tpu.matmul %28, %29, %cst_19 {dimension_numbers = #tpu.dot_dimension_numbers<[1], [0], [0], [1], [0, 0, 1, 1], [], []>} : vector<256x128xbf16>, vector<128x128xbf16>, vector<256x128xf32> -> vector<256x128xf32>
      %31 = arith.truncf %30 : vector<256x128xf32> to vector<256x128xbf16>
      %c0_20 = arith.constant 0 : index
      %c0_21 = arith.constant 0 : index
      %32 = vector.load %arg7[%c0_20, %c0_21] : memref<256x128xbf16, #tpu.memory_space<vmem>>, vector<256x128xbf16>
      tpu.vector_store %arg7[%c0_20, %c0_21], %31 {strides = array<i32>} : memref<256x128xbf16, #tpu.memory_space<vmem>>, vector<256x128xbf16>,
    } else {
    }
    %c0 = arith.constant 0 : index
    %c0_1 = arith.constant 0 : index
    %3 = vector.load %arg5[%c0, %c0_1] : memref<128x256xbf16, #tpu.memory_space<vmem>>, vector<128x256xbf16>
    %c0_2 = arith.constant 0 : index
    %c0_3 = arith.constant 0 : index
    %4 = vector.load %arg7[%c0_2, %c0_3] : memref<256x128xbf16, #tpu.memory_space<vmem>>, vector<256x128xbf16>
    %cst = arith.constant dense<0.000000e+00> : vector<128x128xf32>
    %5 = tpu.matmul %3, %4, %cst {dimension_numbers = #tpu.dot_dimension_numbers<[1], [0], [0], [1], [0, 0, 1, 1], [], []>} : vector<128x256xbf16>, vector<256x128xbf16>, vector<128x128xf32> -> vector<128x128xf32>
    %6 = tpu.iota {dimensions = array<i32: 1>} : vector<128x128xi32>
    %c10_i32 = arith.constant 10 : i32
    %7 = vector.broadcast %c10_i32 : i32 to vector<128x128xi32>
    %8 = arith.cmpi slt, %6, %7 : vector<128x128xi32>
    %cst_4 = arith.constant -1.000000e+30 : f32
    %9 = vector.broadcast %cst_4 : f32 to vector<128x128xf32>
    %10 = arith.select %8, %5, %9 : vector<128x128xi1>, vector<128x128xf32>
    %cst_5 = arith.constant dense<0xFF800000> : vector<128xf32>
    %11 = vector.multi_reduction <maximumf>, %10, %cst_5 [1] : vector<128x128xf32> to vector<128xf32>
    %12 = vector.shape_cast %11 : vector<128xf32> to vector<128x1xf32>
    %13 = vector.broadcast %12 : vector<128x1xf32> to vector<128x128xf32>
    %14 = arith.subf %10, %13 : vector<128x128xf32>
    %15 = math.exp %14 : vector<128x128xf32>
    %cst_6 = arith.constant dense<0.000000e+00> : vector<128xf32>
    %16 = vector.multi_reduction <add>, %15, %cst_6 [1] : vector<128x128xf32> to vector<128xf32>
    %17 = vector.shape_cast %16 : vector<128xf32> to vector<128x1xf32>
    %18 = math.log %17 : vector<128x1xf32>
    %19 = vector.broadcast %18 : vector<128x1xf32> to vector<128x128xf32>
    %20 = arith.subf %14, %19 : vector<128x128xf32>
    %c0_7 = arith.constant 0 : index
    %c0_8 = arith.constant 0 : index
    %21 = vector.load %arg6[%c0_7, %c0_8] : memref<128x128xf32, #tpu.memory_space<vmem>>, vector<128x128xf32>
    tpu.vector_store %arg6[%c0_7, %c0_8], %20 {strides = array<i32>} : memref<128x128xf32, #tpu.memory_space<vmem>>, vector<128x128xf32>,
    return
  }
  func.func @transform_0(%arg0: i32) -> (i32, i32) {
    %c0_i32 = arith.constant 0 : i32
    %c0_i32_0 = arith.constant 0 : i32
    %c0_i32_1 = arith.constant 0 : i32
    return %c0_i32, %c0_i32_0 : i32, i32
  }
  func.func @transform_1(%arg0: i32) -> (i32, i32) {
    %c0_i32 = arith.constant 0 : i32
    %c0_i32_0 = arith.constant 0 : i32
    %c0_i32_1 = arith.constant 0 : i32
    return %c0_i32, %c0_i32_0 : i32, i32
  }
  func.func @transform_2(%arg0: i32) -> (i32, i32) {
    %c0_i32 = arith.constant 0 : i32
    %c0_i32_0 = arith.constant 0 : i32
    %c0_i32_1 = arith.constant 0 : i32
    return %c0_i32, %c0_i32_0 : i32, i32
  }
  func.func @transform_3(%arg0: i32) -> (i32, i32) {
    %c0_i32 = arith.constant 0 : i32
    %c0_i32_0 = arith.constant 0 : i32
    %c0_i32_1 = arith.constant 0 : i32
    return %c0_i32, %c0_i32_0 : i32, i32
  }
  func.func @transform_4(%arg0: i32) -> (i32, i32) {
    %c0_i32 = arith.constant 0 : i32
    %c0_i32_0 = arith.constant 0 : i32
    return %arg0, %c0_i32 : i32, i32
  }
  func.func @transform_5(%arg0: i32) -> (i32, i32) {
    %c0_i32 = arith.constant 0 : i32
    %c0_i32_0 = arith.constant 0 : i32
    return %arg0, %c0_i32 : i32, i32
  }
}

</mosaic_0001>

<llo_original>
// kernel: tpu_custom_call.1
$region0: #{tpu_custom_call.1}
  #allocation0 [shape = 'u32[]', space=smem, size = 0x4, offset = 0x4, fixed_abs, tag = 'smem constant byte address 0x4 - core index']
  #allocation1 [shape = 'u32[144,128]{1,0:T(1,128)}', space=vmem, size = 0x12000, scoped, tag = 'internal scratch']
  #allocation2 [shape = 'bf16[256,128]{1,0:T(16,128)(2,1)}', space=vmem, size = 0x10000, scoped, tag = 'scratch operand']
  %s0 = inlined_call_operand.hbm [shape: bf16[512,128], index: 0, kind: input, shape index: {}]
  %s1 = inlined_call_operand.hbm [shape: bf16[128,128], index: 1, kind: input, shape index: {}]
  %s2 = inlined_call_operand.hbm [shape: bf16[256,512], index: 2, kind: input, shape index: {}]
  %s3 = inlined_call_operand.hbm [shape: bf16[128,128], index: 3, kind: input, shape index: {}]
  %s4 = inlined_call_operand.hbm [shape: bf16[128,256], index: 4, kind: input, shape index: {}]
  %s5 = inlined_call_operand.hbm [shape: f32[128,128], index: 5, kind: output, shape index: {}]
  %s6 = sld [smem:[#allocation0]]
  $region54: #{tpu_custom_call.1} parent=0
    _
  %s8 = ssub.s32 1, %s6
  %s9 = scalar_select 0, %s8, %s6
  $region1: #{tpu_custom_call.1} parent=0
    #allocation3 [shape = 'u8[131072]{0}', space=vmem, size = 0x20000, scoped, tag = 'input window, operand 0, single buffered']
    #allocation4 [shape = 's32[1]{0}', space=sflag, size = 0x4, scoped, tag = 'scoped memory for tpu_custom_call.1']
    #allocation5 [shape = 's32[1]{0}', space=sflag, size = 0x4, scoped, tag = 'scoped memory for tpu_custom_call.1']
    #allocation6 [shape = 'u8[32768]{0}', space=vmem, size = 0x8000, scoped, tag = 'input window, operand 1, single buffered']
    #allocation7 [shape = 's32[1]{0}', space=sflag, size = 0x4, scoped, tag = 'scoped memory for tpu_custom_call.1']
    #allocation8 [shape = 'u8[262144]{0}', space=vmem, size = 0x40000, scoped, tag = 'input window, operand 2, single buffered']
    #allocation9 [shape = 'u8[32768]{0}', space=vmem, size = 0x8000, scoped, tag = 'input window, operand 3, single buffered']
    #allocation10 [shape = 's32[1]{0}', space=sflag, size = 0x4, scoped, tag = 'scoped memory for tpu_custom_call.1']
    #allocation11 [shape = 'u8[65536]{0}', space=vmem, size = 0x10000, scoped, tag = 'input window, operand 4, single buffered']
    #allocation12 [shape = 'u8[65536]{0}', space=vmem, size = 0x10000, scoped, tag = 'output window, operand 0, single buffered']
    %10 = vsyncpa [#allocation4], 0
    %11 = vsyncpa [#allocation7], 0
    %12 = vsyncpa [#allocation10], 0
    %13 = vsyncpa [#allocation5], 0
    // Predicated region
    $region2: #{tpu_custom_call.1} parent=1 // pred_check
      _
    $region3: #{tpu_custom_call.1} parent=1 // pred_check_branch
      %15 = sbr.rel (0) target = $region5
    $region4: #{tpu_custom_call.1} parent=1 // pred_region
      %s17 = ssub.s32 4096, 4096
      %18 = vsyncadd [#allocation4], %s17
      %s19 = sshll.u32 [#allocation3], 4
      %s20 = int_to_ptr.vmem [resolvable:$true] %s19
      %25 = dma.hbm_to_vmem [thread:$0]  %s0, 4096, %s20, [#allocation4], 64, 64, 4
    $region5: #{tpu_custom_call.1} parent=1 // pred_fallthru
      _
    // Predicated region
    $region6: #{tpu_custom_call.1} parent=1 // pred_check
      _
    $region7: #{tpu_custom_call.1} parent=1 // pred_check_branch
      %27 = sbr.rel (0) target = $region9
    $region8: #{tpu_custom_call.1} parent=1 // pred_region
      %s29 = ssub.s32 1024, 1024
      %30 = vsyncadd [#allocation7], %s29
      %s31 = sshll.u32 [#allocation6], 4
      %s32 = int_to_ptr.vmem [resolvable:$true] %s31
      %37 = dma.hbm_to_vmem [thread:$0]  %s1, 1024, %s32, [#allocation7], 64, 64, 4
    $region9: #{tpu_custom_call.1} parent=1 // pred_fallthru
      _
    // Predicated region
    $region10: #{tpu_custom_call.1} parent=1 // pred_check
      _
    $region11: #{tpu_custom_call.1} parent=1 // pred_check_branch
      %39 = sbr.rel (0) target = $region13
    $region12: #{tpu_custom_call.1} parent=1 // pred_region
      %s41 = ssub.s32 8192, 8192
      %42 = vsyncadd [#allocation7], %s41
      %s43 = sshll.u32 [#allocation8], 4
      %s44 = int_to_ptr.vmem [resolvable:$true] %s43
      %49 = dma.hbm_to_vmem [thread:$0]  %s2, 8192, %s44, [#allocation7], 256, 256, 16
    $region13: #{tpu_custom_call.1} parent=1 // pred_fallthru
      _
    // Predicated region
    $region14: #{tpu_custom_call.1} parent=1 // pred_check
      _
    $region15: #{tpu_custom_call.1} parent=1 // pred_check_branch
      %51 = sbr.rel (0) target = $region17
    $region16: #{tpu_custom_call.1} parent=1 // pred_region
      %s53 = ssub.s32 1024, 1024
      %54 = vsyncadd [#allocation10], %s53
      %s55 = sshll.u32 [#allocation9], 4
      %s56 = int_to_ptr.vmem [resolvable:$true] %s55
      %61 = dma.hbm_to_vmem [thread:$0]  %s3, 1024, %s56, [#allocation10], 64, 64, 4
    $region17: #{tpu_custom_call.1} parent=1 // pred_fallthru
      _
    // Predicated region
    $region18: #{tpu_custom_call.1} parent=1 // pred_check
      _
    $region19: #{tpu_custom_call.1} parent=1 // pred_check_branch
      %63 = sbr.rel (0) target = $region21
    $region20: #{tpu_custom_call.1} parent=1 // pred_region
      %s65 = ssub.s32 2048, 2048
      %66 = vsyncadd [#allocation10], %s65
      %s67 = sshll.u32 [#allocation11], 4
      %s68 = int_to_ptr.vmem [resolvable:$true] %s67
      %73 = dma.hbm_to_vmem [thread:$0]  %s4, 2048, %s68, [#allocation10], 128, 128, 8
    $region21: #{tpu_custom_call.1} parent=1 // pred_fallthru
      _
    // Predicated region
    $region22: #{tpu_custom_call.1} parent=1 // pred_check
      _
    $region23: #{tpu_custom_call.1} parent=1 // pred_check_branch
      %75 = sbr.rel (0) target = $region25
    $region24: #{tpu_custom_call.1} parent=1 // pred_region
      %76 = dma.done [#allocation4], 4096
    $region25: #{tpu_custom_call.1} parent=1 // pred_fallthru
      _
    // Predicated region
    $region26: #{tpu_custom_call.1} parent=1 // pred_check
      _
    $region27: #{tpu_custom_call.1} parent=1 // pred_check_branch
      %78 = sbr.rel (0) target = $region29
    $region28: #{tpu_custom_call.1} parent=1 // pred_region
      %79 = dma.done [#allocation7], 1024
    $region29: #{tpu_custom_call.1} parent=1 // pred_fallthru
      _
    // Predicated region
    $region30: #{tpu_custom_call.1} parent=1 // pred_check
      _
    $region31: #{tpu_custom_call.1} parent=1 // pred_check_branch
      %81 = sbr.rel (0) target = $region33
    $region32: #{tpu_custom_call.1} parent=1 // pred_region
      %82 = dma.done [#allocation7], 8192
    $region33: #{tpu_custom_call.1} parent=1 // pred_fallthru
      _
    // Predicated region
    $region34: #{tpu_custom_call.1} parent=1 // pred_check
      _
    $region35: #{tpu_custom_call.1} parent=1 // pred_check_branch
      %84 = sbr.rel (0) target = $region37
    $region36: #{tpu_custom_call.1} parent=1 // pred_region
      %85 = dma.done [#allocation10], 1024
    $region37: #{tpu_custom_call.1} parent=1 // pred_fallthru
      _
    // Predicated region
    $region38: #{tpu_custom_call.1} parent=1 // pred_check
      _
    $region39: #{tpu_custom_call.1} parent=1 // pred_check_branch
      %87 = sbr.rel (0) target = $region41
    $region40: #{tpu_custom_call.1} parent=1 // pred_region
      %88 = dma.done [#allocation10], 2048
    $region41: #{tpu_custom_call.1} parent=1 // pred_fallthru
      _
    %p90 = scmp.eq.s32.totalorder 0, 0
    // Predicated region
    $region42: #{tpu_custom_call.1} parent=1 // pred_check
      %p91 = pneg %p90
    $region43: #{tpu_custom_call.1} parent=1 // pred_check_branch
      %93 = sbr.rel (%p91) target = $region45
    $region44: #{tpu_custom_call.1} parent=1 // pred_region
      %v94 = vld [vmem:[#allocation3] sm:$0xf]
      %v95 = vld [vmem:[#allocation3 + $0x4] sm:$0xf]
      %v96 = vld [vmem:[#allocation3 + $0x8] sm:$0xf]
      %v97 = vld [vmem:[#allocation3 + $0xc] sm:$0xf]
      %v98 = vld [vmem:[#allocation3 + $0x10] sm:$0xf]
      %v99 = vld [vmem:[#allocation3 + $0x14] sm:$0xf]
      %v100 = vld [vmem:[#allocation3 + $0x18] sm:$0xf]
      %v101 = vld [vmem:[#allocation3 + $0x1c] sm:$0xf]
      %v102 = vld [vmem:[#allocation3 + $0x20] sm:$0xf]
      %v103 = vld [vmem:[#allocation3 + $0x24] sm:$0xf]
      %v104 = vld [vmem:[#allocation3 + $0x28] sm:$0xf]
      %v105 = vld [vmem:[#allocation3 + $0x2c] sm:$0xf]
      %v106 = vld [vmem:[#allocation3 + $0x30] sm:$0xf]
      %v107 = vld [vmem:[#allocation3 + $0x34] sm:$0xf]
      %v108 = vld [vmem:[#allocation3 + $0x38] sm:$0xf]
      %v109 = vld [vmem:[#allocation3 + $0x3c] sm:$0xf]
      %v110 = vld [vmem:[#allocation3 + $0x40] sm:$0xf]
      %v111 = vld [vmem:[#allocation3 + $0x44] sm:$0xf]
      %v112 = vld [vmem:[#allocation3 + $0x48] sm:$0xf]
      %v113 = vld [vmem:[#allocation3 + $0x4c] sm:$0xf]
      %v114 = vld [vmem:[#allocation3 + $0x50] sm:$0xf]
      %v115 = vld [vmem:[#allocation3 + $0x54] sm:$0xf]
      %v116 = vld [vmem:[#allocation3 + $0x58] sm:$0xf]
      %v117 = vld [vmem:[#allocation3 + $0x5c] sm:$0xf]
      %v118 = vld [vmem:[#allocation3 + $0x60] sm:$0xf]
      %v119 = vld [vmem:[#allocation3 + $0x64] sm:$0xf]
      %v120 = vld [vmem:[#allocation3 + $0x68] sm:$0xf]
      %v121 = vld [vmem:[#allocation3 + $0x6c] sm:$0xf]
      %v122 = vld [vmem:[#allocation3 + $0x70] sm:$0xf]
      %v123 = vld [vmem:[#allocation3 + $0x74] sm:$0xf]
      %v124 = vld [vmem:[#allocation3 + $0x78] sm:$0xf]
      %v125 = vld [vmem:[#allocation3 + $0x7c] sm:$0xf]
      %v126 = vld [vmem:[#allocation3 + $0x80] sm:$0xf]
      %v127 = vld [vmem:[#allocation3 + $0x84] sm:$0xf]
      %v128 = vld [vmem:[#allocation3 + $0x88] sm:$0xf]
      %v129 = vld [vmem:[#allocation3 + $0x8c] sm:$0xf]
      %v130 = vld [vmem:[#allocation3 + $0x90] sm:$0xf]
      %v131 = vld [vmem:[#allocation3 + $0x94] sm:$0xf]
      %v132 = vld [vmem:[#allocation3 + $0x98] sm:$0xf]
      %v133 = vld [vmem:[#allocation3 + $0x9c] sm:$0xf]
      %v134 = vld [vmem:[#allocation3 + $0xa0] sm:$0xf]
      %v135 = vld [vmem:[#allocation3 + $0xa4] sm:$0xf]
      %v136 = vld [vmem:[#allocation3 + $0xa8] sm:$0xf]
      %v137 = vld [vmem:[#allocation3 + $0xac] sm:$0xf]
      %v138 = vld [vmem:[#allocation3 + $0xb0] sm:$0xf]
      %v139 = vld [vmem:[#allocation3 + $0xb4] sm:$0xf]
      %v140 = vld [vmem:[#allocation3 + $0xb8] sm:$0xf]
      %v141 = vld [vmem:[#allocation3 + $0xbc] sm:$0xf]
      %v142 = vld [vmem:[#allocation3 + $0xc0] sm:$0xf]
      %v143 = vld [vmem:[#allocation3 + $0xc4] sm:$0xf]
      %v144 = vld [vmem:[#allocation3 + $0xc8] sm:$0xf]
      %v145 = vld [vmem:[#allocation3 + $0xcc] sm:$0xf]
      %v146 = vld [vmem:[#allocation3 + $0xd0] sm:$0xf]
      %v147 = vld [vmem:[#allocation3 + $0xd4] sm:$0xf]
      %v148 = vld [vmem:[#allocation3 + $0xd8] sm:$0xf]
      %v149 = vld [vmem:[#allocation3 + $0xdc] sm:$0xf]
      %v150 = vld [vmem:[#allocation3 + $0xe0] sm:$0xf]
      %v151 = vld [vmem:[#allocation3 + $0xe4] sm:$0xf]
      %v152 = vld [vmem:[#allocation3 + $0xe8] sm:$0xf]
      %v153 = vld [vmem:[#allocation3 + $0xec] sm:$0xf]
      %v154 = vld [vmem:[#allocation3 + $0xf0] sm:$0xf]
      %v155 = vld [vmem:[#allocation3 + $0xf4] sm:$0xf]
      %v156 = vld [vmem:[#allocation3 + $0xf8] sm:$0xf]
      %v157 = vld [vmem:[#allocation3 + $0xfc] sm:$0xf]
      %v158 = vld [vmem:[#allocation6] sm:$0xf]
      %v159 = vld [vmem:[#allocation6 + $0x4] sm:$0xf]
      %v160 = vld [vmem:[#allocation6 + $0x8] sm:$0xf]
      %v161 = vld [vmem:[#allocation6 + $0xc] sm:$0xf]
      %v162 = vld [vmem:[#allocation6 + $0x10] sm:$0xf]
      %v163 = vld [vmem:[#allocation6 + $0x14] sm:$0xf]
      %v164 = vld [vmem:[#allocation6 + $0x18] sm:$0xf]
      %v165 = vld [vmem:[#allocation6 + $0x1c] sm:$0xf]
      %v166 = vld [vmem:[#allocation6 + $0x20] sm:$0xf]
      %v167 = vld [vmem:[#allocation6 + $0x24] sm:$0xf]
      %v168 = vld [vmem:[#allocation6 + $0x28] sm:$0xf]
      %v169 = vld [vmem:[#allocation6 + $0x2c] sm:$0xf]
      %v170 = vld [vmem:[#allocation6 + $0x30] sm:$0xf]
      %v171 = vld [vmem:[#allocation6 + $0x34] sm:$0xf]
      %v172 = vld [vmem:[#allocation6 + $0x38] sm:$0xf]
      %v173 = vld [vmem:[#allocation6 + $0x3c] sm:$0xf]
      %v238 = vunpack.c.l.b16 %v94
      %v239 = vunpack.c.l.b16 %v95
      %v240 = vunpack.c.l.b16 %v96
      %v241 = vunpack.c.l.b16 %v97
      %v242 = vunpack.c.l.b16 %v98
      %v243 = vunpack.c.l.b16 %v99
      %v244 = vunpack.c.l.b16 %v100
      %v245 = vunpack.c.l.b16 %v101
      %v246 = vunpack.c.l.b16 %v102
      %v247 = vunpack.c.l.b16 %v103
      %v248 = vunpack.c.l.b16 %v104
      %v249 = vunpack.c.l.b16 %v105
      %v250 = vunpack.c.l.b16 %v106
      %v251 = vunpack.c.l.b16 %v107
      %v252 = vunpack.c.l.b16 %v108
      %v253 = vunpack.c.l.b16 %v109
      %v254 = vunpack.c.l.b16 %v110
      %v255 = vunpack.c.l.b16 %v111
      %v256 = vunpack.c.l.b16 %v112
      %v257 = vunpack.c.l.b16 %v113
      %v258 = vunpack.c.l.b16 %v114
      %v259 = vunpack.c.l.b16 %v115
      %v260 = vunpack.c.l.b16 %v116
      %v261 = vunpack.c.l.b16 %v117
      %v262 = vunpack.c.l.b16 %v118
      %v263 = vunpack.c.l.b16 %v119
      %v264 = vunpack.c.l.b16 %v120
      %v265 = vunpack.c.l.b16 %v121
      %v266 = vunpack.c.l.b16 %v122
      %v267 = vunpack.c.l.b16 %v123
      %v268 = vunpack.c.l.b16 %v124
      %v269 = vunpack.c.l.b16 %v125
      %v270 = vunpack.c.l.b16 %v126
      %v271 = vunpack.c.l.b16 %v127
      %v272 = vunpack.c.l.b16 %v128
      %v273 = vunpack.c.l.b16 %v129
      %v274 = vunpack.c.l.b16 %v130
      %v275 = vunpack.c.l.b16 %v131
      %v276 = vunpack.c.l.b16 %v132
      %v277 = vunpack.c.l.b16 %v133
      %v278 = vunpack.c.l.b16 %v134
      %v279 = vunpack.c.l.b16 %v135
      %v280 = vunpack.c.l.b16 %v136
      %v281 = vunpack.c.l.b16 %v137
      %v282 = vunpack.c.l.b16 %v138
      %v283 = vunpack.c.l.b16 %v139
      %v284 = vunpack.c.l.b16 %v140
      %v285 = vunpack.c.l.b16 %v141
      %v286 = vunpack.c.l.b16 %v142
      %v287 = vunpack.c.l.b16 %v143
      %v288 = vunpack.c.l.b16 %v144
      %v289 = vunpack.c.l.b16 %v145
      %v290 = vunpack.c.l.b16 %v146
      %v291 = vunpack.c.l.b16 %v147
      %v292 = vunpack.c.l.b16 %v148
      %v293 = vunpack.c.l.b16 %v149
      %v294 = vunpack.c.l.b16 %v150
      %v295 = vunpack.c.l.b16 %v151
      %v296 = vunpack.c.l.b16 %v152
      %v297 = vunpack.c.l.b16 %v153
      %v298 = vunpack.c.l.b16 %v154
      %v299 = vunpack.c.l.b16 %v155
      %v300 = vunpack.c.l.b16 %v156
      %v301 = vunpack.c.l.b16 %v157
      %v302 = vpack.c.b16 %v239, %v238
      %v303 = vpack.c.b16 %v241, %v240
      %v304 = vpack.c.b16 %v243, %v242
      %v305 = vpack.c.b16 %v245, %v244
      %v306 = vpack.c.b16 %v247, %v246
      %v307 = vpack.c.b16 %v249, %v248
      %v308 = vpack.c.b16 %v251, %v250
      %v309 = vpack.c.b16 %v253, %v252
      %v310 = vpack.c.b16 %v255, %v254
      %v311 = vpack.c.b16 %v257, %v256
      %v312 = vpack.c.b16 %v259, %v258
      %v313 = vpack.c.b16 %v261, %v260
      %v314 = vpack.c.b16 %v263, %v262
      %v315 = vpack.c.b16 %v265, %v264
      %v316 = vpack.c.b16 %v267, %v266
      %v317 = vpack.c.b16 %v269, %v268
      %v318 = vpack.c.b16 %v271, %v270
      %v319 = vpack.c.b16 %v273, %v272
      %v320 = vpack.c.b16 %v275, %v274
      %v321 = vpack.c.b16 %v277, %v276
      %v322 = vpack.c.b16 %v279, %v278
      %v323 = vpack.c.b16 %v281, %v280
      %v324 = vpack.c.b16 %v283, %v282
      %v325 = vpack.c.b16 %v285, %v284
      %v326 = vpack.c.b16 %v287, %v286
      %v327 = vpack.c.b16 %v289, %v288
      %v328 = vpack.c.b16 %v291, %v290
      %v329 = vpack.c.b16 %v293, %v292
      %v330 = vpack.c.b16 %v295, %v294
      %v331 = vpack.c.b16 %v297, %v296
      %v332 = vpack.c.b16 %v299, %v298
      %v333 = vpack.c.b16 %v301, %v300
      %v382 = vunpack.c.l.b16 %v158
      %v383 = vunpack.c.l.b16 %v159
      %v384 = vunpack.c.l.b16 %v160
      %v385 = vunpack.c.l.b16 %v161
      %v386 = vunpack.c.l.b16 %v162
      %v387 = vunpack.c.l.b16 %v163
      %v388 = vunpack.c.l.b16 %v164
      %v389 = vunpack.c.l.b16 %v165
      %v390 = vunpack.c.l.b16 %v166
      %v391 = vunpack.c.l.b16 %v167
      %v392 = vunpack.c.l.b16 %v168
      %v393 = vunpack.c.l.b16 %v169
      %v394 = vunpack.c.l.b16 %v170
      %v395 = vunpack.c.l.b16 %v171
      %v396 = vunpack.c.l.b16 %v172
      %v397 = vunpack.c.l.b16 %v173
      %v398 = vpack.c.b16 %v383, %v382
      %v399 = vpack.c.b16 %v385, %v384
      %v400 = vpack.c.b16 %v387, %v386
      %v401 = vpack.c.b16 %v389, %v388
      %v402 = vpack.c.b16 %v391, %v390
      %v403 = vpack.c.b16 %v393, %v392
      %v404 = vpack.c.b16 %v395, %v394
      %v405 = vpack.c.b16 %v397, %v396
      %414 = vmatprep.subr.bf16.mxu0 0
      %415 = vmatpush1.bf16.msra.mxu0 %v398
      %416 = vmatprep.subr.bf16.mxu0 0
      %417 = vmatpush1.bf16.msra.mxu0 %v399
      %418 = vmatprep.subr.bf16.mxu0 0
      %419 = vmatpush1.bf16.msra.mxu0 %v400
      %420 = vmatprep.subr.bf16.mxu0 0
      %421 = vmatpush1.bf16.msra.mxu0 %v401
      %422 = vmatprep.subr.bf16.mxu0 0
      %423 = vmatpush1.bf16.msra.mxu0 %v402
      %424 = vmatprep.subr.bf16.mxu0 0
      %425 = vmatpush1.bf16.msra.mxu0 %v403
      %426 = vmatprep.subr.bf16.mxu0 0
      %427 = vmatpush1.bf16.msra.mxu0 %v404
      %428 = vmatprep.subr.bf16.mxu0 0
      %429 = vmatpush1.bf16.msra.mxu0 %v405
      %430 = vmatprep.subr.bf16.mxu0 0
      %431 = vmatpush1.bf16.msra.mxu0 0
      %432 = vmatprep.subr.bf16.mxu0 0
      %433 = vmatpush1.bf16.msra.mxu0 0
      %434 = vmatprep.subr.bf16.mxu0 0
      %435 = vmatpush1.bf16.msra.mxu0 0
      %436 = vmatprep.subr.bf16.mxu0 0
      %437 = vmatpush1.bf16.msra.mxu0 0
      %438 = vmatprep.subr.bf16.mxu0 0
      %439 = vmatpush1.bf16.msra.mxu0 0
      %440 = vmatprep.subr.bf16.mxu0 0
      %441 = vmatpush1.bf16.msra.mxu0 0
      %442 = vmatprep.subr.bf16.mxu0 0
      %443 = vmatpush1.bf16.msra.mxu0 0
      %444 = vmatprep.subr.bf16.mxu0 0
      %445 = vmatpush1.bf16.msra.mxu0 0
      %446 = vmatprep.mubr.bf16.mxu0 0
      %447 = vmatmul.mubr.bf16.gmra.mrb[0].mxu0 %v302
      %v448 = vpop.f32.mrb[0].mxu0
      %v449 = vadd.f32 0.0, %v448
      %v450 = vpop.f32.mrb[0].mxu0
      %v451 = vpop.f32.mrb[0].mxu0
      %v452 = vadd.f32 0.0, %v451
      %v453 = vpop.f32.mrb[0].mxu0
      %454 = vmatprep.mubr.bf16.mxu0 0
      %455 = vmatmul.mubr.bf16.gmra.mrb[0].mxu0 %v303
      %v456 = vpop.f32.mrb[0].mxu0
      %v457 = vadd.f32 0.0, %v456
      %v458 = vpop.f32.mrb[0].mxu0
      %v459 = vpop.f32.mrb[0].mxu0
      %v460 = vadd.f32 0.0, %v459
      %v461 = vpop.f32.mrb[0].mxu0
      %462 = vmatprep.mubr.bf16.mxu0 0
      %463 = vmatmul.mubr.bf16.gmra.mrb[0].mxu0 %v304
      %v464 = vpop.f32.mrb[0].mxu0
      %v465 = vadd.f32 0.0, %v464
      %v466 = vpop.f32.mrb[0].mxu0
      %v467 = vpop.f32.mrb[0].mxu0
      %v468 = vadd.f32 0.0, %v467
      %v469 = vpop.f32.mrb[0].mxu0
      %470 = vmatprep.mubr.bf16.mxu0 0
      %471 = vmatmul.mubr.bf16.gmra.mrb[0].mxu0 %v305
      %v472 = vpop.f32.mrb[0].mxu0
      %v473 = vadd.f32 0.0, %v472
      %v474 = vpop.f32.mrb[0].mxu0
      %v475 = vpop.f32.mrb[0].mxu0
      %v476 = vadd.f32 0.0, %v475
      %v477 = vpop.f32.mrb[0].mxu0
      %478 = vmatprep.mubr.bf16.mxu0 0
      %479 = vmatmul.mubr.bf16.gmra.mrb[0].mxu0 %v306
      %v480 = vpop.f32.mrb[0].mxu0
      %v481 = vadd.f32 0.0, %v480
      %v482 = vpop.f32.mrb[0].mxu0
      %v483 = vpop.f32.mrb[0].mxu0
      %v484 = vadd.f32 0.0, %v483
      %v485 = vpop.f32.mrb[0].mxu0
      %486 = vmatprep.mubr.bf16.mxu0 0
      %487 = vmatmul.mubr.bf16.gmra.mrb[0].mxu0 %v307
      %v488 = vpop.f32.mrb[0].mxu0
      %v489 = vadd.f32 0.0, %v488
      %v490 = vpop.f32.mrb[0].mxu0
      %v491 = vpop.f32.mrb[0].mxu0
      %v492 = vadd.f32 0.0, %v491
      %v493 = vpop.f32.mrb[0].mxu0
      %494 = vmatprep.mubr.bf16.mxu0 0
      %495 = vmatmul.mubr.bf16.gmra.mrb[0].mxu0 %v308
      %v496 = vpop.f32.mrb[0].mxu0
      %v497 = vadd.f32 0.0, %v496
      %v498 = vpop.f32.mrb[0].mxu0
      %v499 = vpop.f32.mrb[0].mxu0
      %v500 = vadd.f32 0.0, %v499
      %v501 = vpop.f32.mrb[0].mxu0
      %502 = vmatprep.mubr.bf16.mxu0 0
      %503 = vmatmul.mubr.bf16.gmra.mrb[0].mxu0 %v309
      %v504 = vpop.f32.mrb[0].mxu0
      %v505 = vadd.f32 0.0, %v504
      %v506 = vpop.f32.mrb[0].mxu0
      %v507 = vpop.f32.mrb[0].mxu0
      %v508 = vadd.f32 0.0, %v507
      %v509 = vpop.f32.mrb[0].mxu0
      %510 = vmatprep.mubr.bf16.mxu0 0
      %511 = vmatmul.mubr.bf16.gmra.mrb[0].mxu0 %v310
      %v512 = vpop.f32.mrb[0].mxu0
      %v513 = vadd.f32 0.0, %v512
      %v514 = vpop.f32.mrb[0].mxu0
      %v515 = vpop.f32.mrb[0].mxu0
      %v516 = vadd.f32 0.0, %v515
      %v517 = vpop.f32.mrb[0].mxu0
      %518 = vmatprep.mubr.bf16.mxu0 0
      %519 = vmatmul.mubr.bf16.gmra.mrb[0].mxu0 %v311
      %v520 = vpop.f32.mrb[0].mxu0
      %v521 = vadd.f32 0.0, %v520
      %v522 = vpop.f32.mrb[0].mxu0
      %v523 = vpop.f32.mrb[0].mxu0
      %v524 = vadd.f32 0.0, %v523
      %v525 = vpop.f32.mrb[0].mxu0
      %526 = vmatprep.mubr.bf16.mxu0 0
      %527 = vmatmul.mubr.bf16.gmra.mrb[0].mxu0 %v312
      %v528 = vpop.f32.mrb[0].mxu0
      %v529 = vadd.f32 0.0, %v528
      %v530 = vpop.f32.mrb[0].mxu0
      %v531 = vpop.f32.mrb[0].mxu0
      %v532 = vadd.f32 0.0, %v531
      %v533 = vpop.f32.mrb[0].mxu0
      %534 = vmatprep.mubr.bf16.mxu0 0
      %535 = vmatmul.mubr.bf16.gmra.mrb[0].mxu0 %v313
      %v536 = vpop.f32.mrb[0].mxu0
      %v537 = vadd.f32 0.0, %v536
      %v538 = vpop.f32.mrb[0].mxu0
      %v539 = vpop.f32.mrb[0].mxu0
      %v540 = vadd.f32 0.0, %v539
      %v541 = vpop.f32.mrb[0].mxu0
      %542 = vmatprep.mubr.bf16.mxu0 0
      %543 = vmatmul.mubr.bf16.gmra.mrb[0].mxu0 %v314
      %v544 = vpop.f32.mrb[0].mxu0
      %v545 = vadd.f32 0.0, %v544
      %v546 = vpop.f32.mrb[0].mxu0
      %v547 = vpop.f32.mrb[0].mxu0
      %v548 = vadd.f32 0.0, %v547
      %v549 = vpop.f32.mrb[0].mxu0
      %550 = vmatprep.mubr.bf16.mxu0 0
      %551 = vmatmul.mubr.bf16.gmra.mrb[0].mxu0 %v315
      %v552 = vpop.f32.mrb[0].mxu0
      %v553 = vadd.f32 0.0, %v552
      %v554 = vpop.f32.mrb[0].mxu0
      %v555 = vpop.f32.mrb[0].mxu0
      %v556 = vadd.f32 0.0, %v555
      %v557 = vpop.f32.mrb[0].mxu0
      %558 = vmatprep.mubr.bf16.mxu0 0
      %559 = vmatmul.mubr.bf16.gmra.mrb[0].mxu0 %v316
      %v560 = vpop.f32.mrb[0].mxu0
      %v561 = vadd.f32 0.0, %v560
      %v562 = vpop.f32.mrb[0].mxu0
      %v563 = vpop.f32.mrb[0].mxu0
      %v564 = vadd.f32 0.0, %v563
      %v565 = vpop.f32.mrb[0].mxu0
      %566 = vmatprep.mubr.bf16.mxu0 0
      %567 = vmatmul.mubr.bf16.gmra.mrb[0].mxu0 %v317
      %v568 = vpop.f32.mrb[0].mxu0
      %v569 = vadd.f32 0.0, %v568
      %v570 = vpop.f32.mrb[0].mxu0
      %v571 = vpop.f32.mrb[0].mxu0
      %v572 = vadd.f32 0.0, %v571
      %v573 = vpop.f32.mrb[0].mxu0
      %574 = vmatprep.mubr.bf16.mxu0 0
      %575 = vmatmul.mubr.bf16.gmra.mrb[0].mxu0 %v318
      %v576 = vpop.f32.mrb[0].mxu0
      %v577 = vadd.f32 0.0, %v576
      %v578 = vpop.f32.mrb[0].mxu0
      %v579 = vpop.f32.mrb[0].mxu0
      %v580 = vadd.f32 0.0, %v579
      %v581 = vpop.f32.mrb[0].mxu0
      %582 = vmatprep.mubr.bf16.mxu0 0
      %583 = vmatmul.mubr.bf16.gmra.mrb[0].mxu0 %v319
      %v584 = vpop.f32.mrb[0].mxu0
      %v585 = vadd.f32 0.0, %v584
      %v586 = vpop.f32.mrb[0].mxu0
      %v587 = vpop.f32.mrb[0].mxu0
      %v588 = vadd.f32 0.0, %v587
      %v589 = vpop.f32.mrb[0].mxu0
      %590 = vmatprep.mubr.bf16.mxu0 0
      %591 = vmatmul.mubr.bf16.gmra.mrb[0].mxu0 %v320
      %v592 = vpop.f32.mrb[0].mxu0
      %v593 = vadd.f32 0.0, %v592
      %v594 = vpop.f32.mrb[0].mxu0
      %v595 = vpop.f32.mrb[0].mxu0
      %v596 = vadd.f32 0.0, %v595
      %v597 = vpop.f32.mrb[0].mxu0
      %598 = vmatprep.mubr.bf16.mxu0 0
      %599 = vmatmul.mubr.bf16.gmra.mrb[0].mxu0 %v321
      %v600 = vpop.f32.mrb[0].mxu0
      %v601 = vadd.f32 0.0, %v600
      %v602 = vpop.f32.mrb[0].mxu0
      %v603 = vpop.f32.mrb[0].mxu0
      %v604 = vadd.f32 0.0, %v603
      %v605 = vpop.f32.mrb[0].mxu0
      %606 = vmatprep.mubr.bf16.mxu0 0
      %607 = vmatmul.mubr.bf16.gmra.mrb[0].mxu0 %v322
      %v608 = vpop.f32.mrb[0].mxu0
      %v609 = vadd.f32 0.0, %v608
      %v610 = vpop.f32.mrb[0].mxu0
      %v611 = vpop.f32.mrb[0].mxu0
      %v612 = vadd.f32 0.0, %v611
      %v613 = vpop.f32.mrb[0].mxu0
      %614 = vmatprep.mubr.bf16.mxu0 0
      %615 = vmatmul.mubr.bf16.gmra.mrb[0].mxu0 %v323
      %v616 = vpop.f32.mrb[0].mxu0
      %v617 = vadd.f32 0.0, %v616
      %v618 = vpop.f32.mrb[0].mxu0
      %v619 = vpop.f32.mrb[0].mxu0
      %v620 = vadd.f32 0.0, %v619
      %v621 = vpop.f32.mrb[0].mxu0
      %622 = vmatprep.mubr.bf16.mxu0 0
      %623 = vmatmul.mubr.bf16.gmra.mrb[0].mxu0 %v324
      %v624 = vpop.f32.mrb[0].mxu0
      %v625 = vadd.f32 0.0, %v624
      %v626 = vpop.f32.mrb[0].mxu0
      %v627 = vpop.f32.mrb[0].mxu0
      %v628 = vadd.f32 0.0, %v627
      %v629 = vpop.f32.mrb[0].mxu0
      %630 = vmatprep.mubr.bf16.mxu0 0
      %631 = vmatmul.mubr.bf16.gmra.mrb[0].mxu0 %v325
      %v632 = vpop.f32.mrb[0].mxu0
      %v633 = vadd.f32 0.0, %v632
      %v634 = vpop.f32.mrb[0].mxu0
      %v635 = vpop.f32.mrb[0].mxu0
      %v636 = vadd.f32 0.0, %v635
      %v637 = vpop.f32.mrb[0].mxu0
      %638 = vmatprep.mubr.bf16.mxu0 0
      %639 = vmatmul.mubr.bf16.gmra.mrb[0].mxu0 %v326
      %v640 = vpop.f32.mrb[0].mxu0
      %v641 = vadd.f32 0.0, %v640
      %v642 = vpop.f32.mrb[0].mxu0
      %v643 = vpop.f32.mrb[0].mxu0
      %v644 = vadd.f32 0.0, %v643
      %v645 = vpop.f32.mrb[0].mxu0
      %646 = vmatprep.mubr.bf16.mxu0 0
      %647 = vmatmul.mubr.bf16.gmra.mrb[0].mxu0 %v327
      %v648 = vpop.f32.mrb[0].mxu0
      %v649 = vadd.f32 0.0, %v648
      %v650 = vpop.f32.mrb[0].mxu0
      %v651 = vpop.f32.mrb[0].mxu0
      %v652 = vadd.f32 0.0, %v651
      %v653 = vpop.f32.mrb[0].mxu0
      %654 = vmatprep.mubr.bf16.mxu0 0
      %655 = vmatmul.mubr.bf16.gmra.mrb[0].mxu0 %v328
      %v656 = vpop.f32.mrb[0].mxu0
      %v657 = vadd.f32 0.0, %v656
      %v658 = vpop.f32.mrb[0].mxu0
      %v659 = vpop.f32.mrb[0].mxu0
      %v660 = vadd.f32 0.0, %v659
      %v661 = vpop.f32.mrb[0].mxu0
      %662 = vmatprep.mubr.bf16.mxu0 0
      %663 = vmatmul.mubr.bf16.gmra.mrb[0].mxu0 %v329
      %v664 = vpop.f32.mrb[0].mxu0
      %v665 = vadd.f32 0.0, %v664
      %v666 = vpop.f32.mrb[0].mxu0
      %v667 = vpop.f32.mrb[0].mxu0
      %v668 = vadd.f32 0.0, %v667
      %v669 = vpop.f32.mrb[0].mxu0
      %670 = vmatprep.mubr.bf16.mxu0 0
      %671 = vmatmul.mubr.bf16.gmra.mrb[0].mxu0 %v330
      %v672 = vpop.f32.mrb[0].mxu0
      %v673 = vadd.f32 0.0, %v672
      %v674 = vpop.f32.mrb[0].mxu0
      %v675 = vpop.f32.mrb[0].mxu0
      %v676 = vadd.f32 0.0, %v675
      %v677 = vpop.f32.mrb[0].mxu0
      %678 = vmatprep.mubr.bf16.mxu0 0
      %679 = vmatmul.mubr.bf16.gmra.mrb[0].mxu0 %v331
      %v680 = vpop.f32.mrb[0].mxu0
      %v681 = vadd.f32 0.0, %v680
      %v682 = vpop.f32.mrb[0].mxu0
      %v683 = vpop.f32.mrb[0].mxu0
      %v684 = vadd.f32 0.0, %v683
      %v685 = vpop.f32.mrb[0].mxu0
      %686 = vmatprep.mubr.bf16.mxu0 0
      %687 = vmatmul.mubr.bf16.gmra.mrb[0].mxu0 %v332
      %v688 = vpop.f32.mrb[0].mxu0
      %v689 = vadd.f32 0.0, %v688
      %v690 = vpop.f32.mrb[0].mxu0
      %v691 = vpop.f32.mrb[0].mxu0
      %v692 = vadd.f32 0.0, %v691
      %v693 = vpop.f32.mrb[0].mxu0
      %694 = vmatprep.mubr.bf16.mxu0 0
      %695 = vmatmul.mubr.bf16.gmra.mrb[0].mxu0 %v333
      %v696 = vpop.f32.mrb[0].mxu0
      %v697 = vadd.f32 0.0, %v696
      %v698 = vpop.f32.mrb[0].mxu0
      %v699 = vpop.f32.mrb[0].mxu0
      %v700 = vadd.f32 0.0, %v699
      %v701 = vpop.f32.mrb[0].mxu0
      %702 = vdwg.mxu0
      %v703 = vpack.c.bf16 %v452, %v449
      %v704 = vpack.c.bf16 %v460, %v457
      %v705 = vpack.c.bf16 %v468, %v465
      %v706 = vpack.c.bf16 %v476, %v473
      %v707 = vpack.c.bf16 %v484, %v481
      %v708 = vpack.c.bf16 %v492, %v489
      %v709 = vpack.c.bf16 %v500, %v497
      %v710 = vpack.c.bf16 %v508, %v505
      %v711 = vpack.c.bf16 %v516, %v513
      %v712 = vpack.c.bf16 %v524, %v521
      %v713 = vpack.c.bf16 %v532, %v529
      %v714 = vpack.c.bf16 %v540, %v537
      %v715 = vpack.c.bf16 %v548, %v545
      %v716 = vpack.c.bf16 %v556, %v553
      %v717 = vpack.c.bf16 %v564, %v561
      %v718 = vpack.c.bf16 %v572, %v569
      %v719 = vpack.c.bf16 %v580, %v577
      %v720 = vpack.c.bf16 %v588, %v585
      %v721 = vpack.c.bf16 %v596, %v593
      %v722 = vpack.c.bf16 %v604, %v601
      %v723 = vpack.c.bf16 %v612, %v609
      %v724 = vpack.c.bf16 %v620, %v617
      %v725 = vpack.c.bf16 %v628, %v625
      %v726 = vpack.c.bf16 %v636, %v633
      %v727 = vpack.c.bf16 %v644, %v641
      %v728 = vpack.c.bf16 %v652, %v649
      %v729 = vpack.c.bf16 %v660, %v657
      %v730 = vpack.c.bf16 %v668, %v665
      %v731 = vpack.c.bf16 %v676, %v673
      %v732 = vpack.c.bf16 %v684, %v681
      %v733 = vpack.c.bf16 %v692, %v689
      %v734 = vpack.c.bf16 %v700, %v697
      %v735 = vld [vmem:[#allocation8] sm:$0xff]
      %v736 = vld [vmem:[#allocation8 + $0x8] sm:$0xff]
      %v737 = vld [vmem:[#allocation8 + $0x10] sm:$0xff]
      %v738 = vld [vmem:[#allocation8 + $0x18] sm:$0xff]
      %v739 = vld [vmem:[#allocation8 + $0x20] sm:$0xff]
      %v740 = vld [vmem:[#allocation8 + $0x28] sm:$0xff]
      %v741 = vld [vmem:[#allocation8 + $0x30] sm:$0xff]
      %v742 = vld [vmem:[#allocation8 + $0x38] sm:$0xff]
      %v743 = vld [vmem:[#allocation8 + $0x40] sm:$0xff]
      %v744 = vld [vmem:[#allocation8 + $0x48] sm:$0xff]
      %v745 = vld [vmem:[#allocation8 + $0x50] sm:$0xff]
      %v746 = vld [vmem:[#allocation8 + $0x58] sm:$0xff]
      %v747 = vld [vmem:[#allocation8 + $0x60] sm:$0xff]
      %v748 = vld [vmem:[#allocation8 + $0x68] sm:$0xff]
      %v749 = vld [vmem:[#allocation8 + $0x70] sm:$0xff]
      %v750 = vld [vmem:[#allocation8 + $0x78] sm:$0xff]
      %v751 = vld [vmem:[#allocation8 + $0x80] sm:$0xff]
      %v752 = vld [vmem:[#allocation8 + $0x88] sm:$0xff]
      %v753 = vld [vmem:[#allocation8 + $0x90] sm:$0xff]
      %v754 = vld [vmem:[#allocation8 + $0x98] sm:$0xff]
      %v755 = vld [vmem:[#allocation8 + $0xa0] sm:$0xff]
      %v756 = vld [vmem:[#allocation8 + $0xa8] sm:$0xff]
      %v757 = vld [vmem:[#allocation8 + $0xb0] sm:$0xff]
      %v758 = vld [vmem:[#allocation8 + $0xb8] sm:$0xff]
      %v759 = vld [vmem:[#allocation8 + $0xc0] sm:$0xff]
      %v760 = vld [vmem:[#allocation8 + $0xc8] sm:$0xff]
      %v761 = vld [vmem:[#allocation8 + $0xd0] sm:$0xff]
      %v762 = vld [vmem:[#allocation8 + $0xd8] sm:$0xff]
      %v763 = vld [vmem:[#allocation8 + $0xe0] sm:$0xff]
      %v764 = vld [vmem:[#allocation8 + $0xe8] sm:$0xff]
      %v765 = vld [vmem:[#allocation8 + $0xf0] sm:$0xff]
      %v766 = vld [vmem:[#allocation8 + $0xf8] sm:$0xff]
      %v767 = vld [vmem:[#allocation8 + $0x100] sm:$0xff]
      %v768 = vld [vmem:[#allocation8 + $0x108] sm:$0xff]
      %v769 = vld [vmem:[#allocation8 + $0x110] sm:$0xff]
      %v770 = vld [vmem:[#allocation8 + $0x118] sm:$0xff]
      %v771 = vld [vmem:[#allocation8 + $0x120] sm:$0xff]
      %v772 = vld [vmem:[#allocation8 + $0x128] sm:$0xff]
      %v773 = vld [vmem:[#allocation8 + $0x130] sm:$0xff]
      %v774 = vld [vmem:[#allocation8 + $0x138] sm:$0xff]
      %v775 = vld [vmem:[#allocation8 + $0x140] sm:$0xff]
      %v776 = vld [vmem:[#allocation8 + $0x148] sm:$0xff]
      %v777 = vld [vmem:[#allocation8 + $0x150] sm:$0xff]
      %v778 = vld [vmem:[#allocation8 + $0x158] sm:$0xff]
      %v779 = vld [vmem:[#allocation8 + $0x160] sm:$0xff]
      %v780 = vld [vmem:[#allocation8 + $0x168] sm:$0xff]
      %v781 = vld [vmem:[#allocation8 + $0x170] sm:$0xff]
      %v782 = vld [vmem:[#allocation8 + $0x178] sm:$0xff]
      %v783 = vld [vmem:[#allocation8 + $0x180] sm:$0xff]
      %v784 = vld [vmem:[#allocation8 + $0x188] sm:$0xff]
      %v785 = vld [vmem:[#allocation8 + $0x190] sm:$0xff]
      %v786 = vld [vmem:[#allocation8 + $0x198] sm:$0xff]
      %v787 = vld [vmem:[#allocation8 + $0x1a0] sm:$0xff]
      %v788 = vld [vmem:[#allocation8 + $0x1a8] sm:$0xff]
      %v789 = vld [vmem:[#allocation8 + $0x1b0] sm:$0xff]
      %v790 = vld [vmem:[#allocation8 + $0x1b8] sm:$0xff]
      %v791 = vld [vmem:[#allocation8 + $0x1c0] sm:$0xff]
      %v792 = vld [vmem:[#allocation8 + $0x1c8] sm:$0xff]
      %v793 = vld [vmem:[#allocation8 + $0x1d0] sm:$0xff]
      %v794 = vld [vmem:[#allocation8 + $0x1d8] sm:$0xff]
      %v795 = vld [vmem:[#allocation8 + $0x1e0] sm:$0xff]
      %v796 = vld [vmem:[#allocation8 + $0x1e8] sm:$0xff]
      %v797 = vld [vmem:[#allocation8 + $0x1f0] sm:$0xff]
      %v798 = vld [vmem:[#allocation8 + $0x1f8] sm:$0xff]
      %v863 = vunpack.c.l.b16 %v735
      %v864 = vunpack.c.h.b16 %v735
      %v865 = vunpack.c.l.b16 %v736
      %v866 = vunpack.c.h.b16 %v736
      %v867 = vunpack.c.l.b16 %v737
      %v868 = vunpack.c.h.b16 %v737
      %v869 = vunpack.c.l.b16 %v738
      %v870 = vunpack.c.h.b16 %v738
      %v871 = vunpack.c.l.b16 %v739
      %v872 = vunpack.c.h.b16 %v739
      %v873 = vunpack.c.l.b16 %v740
      %v874 = vunpack.c.h.b16 %v740
      %v875 = vunpack.c.l.b16 %v741
      %v876 = vunpack.c.h.b16 %v741
      %v877 = vunpack.c.l.b16 %v742
      %v878 = vunpack.c.h.b16 %v742
      %v879 = vunpack.c.l.b16 %v743
      %v880 = vunpack.c.h.b16 %v743
      %v881 = vunpack.c.l.b16 %v744
      %v882 = vunpack.c.h.b16 %v744
      %v883 = vunpack.c.l.b16 %v745
      %v884 = vunpack.c.h.b16 %v745
      %v885 = vunpack.c.l.b16 %v746
      %v886 = vunpack.c.h.b16 %v746
      %v887 = vunpack.c.l.b16 %v747
      %v888 = vunpack.c.h.b16 %v747
      %v889 = vunpack.c.l.b16 %v748
      %v890 = vunpack.c.h.b16 %v748
      %v891 = vunpack.c.l.b16 %v749
      %v892 = vunpack.c.h.b16 %v749
      %v893 = vunpack.c.l.b16 %v750
      %v894 = vunpack.c.h.b16 %v750
      %v895 = vunpack.c.l.b16 %v751
      %v896 = vunpack.c.h.b16 %v751
      %v897 = vunpack.c.l.b16 %v752
      %v898 = vunpack.c.h.b16 %v752
      %v899 = vunpack.c.l.b16 %v753
      %v900 = vunpack.c.h.b16 %v753
      %v901 = vunpack.c.l.b16 %v754
      %v902 = vunpack.c.h.b16 %v754
      %v903 = vunpack.c.l.b16 %v755
      %v904 = vunpack.c.h.b16 %v755
      %v905 = vunpack.c.l.b16 %v756
      %v906 = vunpack.c.h.b16 %v756
      %v907 = vunpack.c.l.b16 %v757
      %v908 = vunpack.c.h.b16 %v757
      %v909 = vunpack.c.l.b16 %v758
      %v910 = vunpack.c.h.b16 %v758
      %v911 = vunpack.c.l.b16 %v759
      %v912 = vunpack.c.h.b16 %v759
      %v913 = vunpack.c.l.b16 %v760
      %v914 = vunpack.c.h.b16 %v760
      %v915 = vunpack.c.l.b16 %v761
      %v916 = vunpack.c.h.b16 %v761
      %v917 = vunpack.c.l.b16 %v762
      %v918 = vunpack.c.h.b16 %v762
      %v919 = vunpack.c.l.b16 %v763
      %v920 = vunpack.c.h.b16 %v763
      %v921 = vunpack.c.l.b16 %v764
      %v922 = vunpack.c.h.b16 %v764
      %v923 = vunpack.c.l.b16 %v765
      %v924 = vunpack.c.h.b16 %v765
      %v925 = vunpack.c.l.b16 %v766
      %v926 = vunpack.c.h.b16 %v766
      %v927 = vunpack.c.l.b16 %v767
      %v928 = vunpack.c.h.b16 %v767
      %v929 = vunpack.c.l.b16 %v768
      %v930 = vunpack.c.h.b16 %v768
      %v931 = vunpack.c.l.b16 %v769
      %v932 = vunpack.c.h.b16 %v769
      %v933 = vunpack.c.l.b16 %v770
      %v934 = vunpack.c.h.b16 %v770
      %v935 = vunpack.c.l.b16 %v771
      %v936 = vunpack.c.h.b16 %v771
      %v937 = vunpack.c.l.b16 %v772
      %v938 = vunpack.c.h.b16 %v772
      %v939 = vunpack.c.l.b16 %v773
      %v940 = vunpack.c.h.b16 %v773
      %v941 = vunpack.c.l.b16 %v774
      %v942 = vunpack.c.h.b16 %v774
      %v943 = vunpack.c.l.b16 %v775
      %v944 = vunpack.c.h.b16 %v775
      %v945 = vunpack.c.l.b16 %v776
      %v946 = vunpack.c.h.b16 %v776
      %v947 = vunpack.c.l.b16 %v777
      %v948 = vunpack.c.h.b16 %v777
      %v949 = vunpack.c.l.b16 %v778
      %v950 = vunpack.c.h.b16 %v778
      %v951 = vunpack.c.l.b16 %v779
      %v952 = vunpack.c.h.b16 %v779
      %v953 = vunpack.c.l.b16 %v780
      %v954 = vunpack.c.h.b16 %v780
      %v955 = vunpack.c.l.b16 %v781
      %v956 = vunpack.c.h.b16 %v781
      %v957 = vunpack.c.l.b16 %v782
      %v958 = vunpack.c.h.b16 %v782
      %v959 = vunpack.c.l.b16 %v783
      %v960 = vunpack.c.h.b16 %v783
      %v961 = vunpack.c.l.b16 %v784
      %v962 = vunpack.c.h.b16 %v784
      %v963 = vunpack.c.l.b16 %v785
      %v964 = vunpack.c.h.b16 %v785
      %v965 = vunpack.c.l.b16 %v786
      %v966 = vunpack.c.h.b16 %v786
      %v967 = vunpack.c.l.b16 %v787
      %v968 = vunpack.c.h.b16 %v787
      %v969 = vunpack.c.l.b16 %v788
      %v970 = vunpack.c.h.b16 %v788
      %v971 = vunpack.c.l.b16 %v789
      %v972 = vunpack.c.h.b16 %v789
      %v973 = vunpack.c.l.b16 %v790
      %v974 = vunpack.c.h.b16 %v790
      %v975 = vunpack.c.l.b16 %v791
      %v976 = vunpack.c.h.b16 %v791
      %v977 = vunpack.c.l.b16 %v792
      %v978 = vunpack.c.h.b16 %v792
      %v979 = vunpack.c.l.b16 %v793
      %v980 = vunpack.c.h.b16 %v793
      %v981 = vunpack.c.l.b16 %v794
      %v982 = vunpack.c.h.b16 %v794
      %v983 = vunpack.c.l.b16 %v795
      %v984 = vunpack.c.h.b16 %v795
      %v985 = vunpack.c.l.b16 %v796
      %v986 = vunpack.c.h.b16 %v796
      %v987 = vunpack.c.l.b16 %v797
      %v988 = vunpack.c.h.b16 %v797
      %v989 = vunpack.c.l.b16 %v798
      %v990 = vunpack.c.h.b16 %v798
      %v991 = vpack.c.b16 %v867, %v863
      %v992 = vpack.c.b16 %v868, %v864
      %v993 = vpack.c.b16 %v869, %v865
      %v994 = vpack.c.b16 %v870, %v866
      %v995 = vpack.c.b16 %v875, %v871
      %v996 = vpack.c.b16 %v876, %v872
      %v997 = vpack.c.b16 %v877, %v873
      %v998 = vpack.c.b16 %v878, %v874
      %v999 = vpack.c.b16 %v883, %v879
      %v1000 = vpack.c.b16 %v884, %v880
      %v1001 = vpack.c.b16 %v885, %v881
      %v1002 = vpack.c.b16 %v886, %v882
      %v1003 = vpack.c.b16 %v891, %v887
      %v1004 = vpack.c.b16 %v892, %v888
      %v1005 = vpack.c.b16 %v893, %v889
      %v1006 = vpack.c.b16 %v894, %v890
      %v1007 = vpack.c.b16 %v899, %v895
      %v1008 = vpack.c.b16 %v900, %v896
      %v1009 = vpack.c.b16 %v901, %v897
      %v1010 = vpack.c.b16 %v902, %v898
      %v1011 = vpack.c.b16 %v907, %v903
      %v1012 = vpack.c.b16 %v908, %v904
      %v1013 = vpack.c.b16 %v909, %v905
      %v1014 = vpack.c.b16 %v910, %v906
      %v1015 = vpack.c.b16 %v915, %v911
      %v1016 = vpack.c.b16 %v916, %v912
      %v1017 = vpack.c.b16 %v917, %v913
      %v1018 = vpack.c.b16 %v918, %v914
      %v1019 = vpack.c.b16 %v923, %v919
      %v1020 = vpack.c.b16 %v924, %v920
      %v1021 = vpack.c.b16 %v925, %v921
      %v1022 = vpack.c.b16 %v926, %v922
      %v1023 = vpack.c.b16 %v931, %v927
      %v1024 = vpack.c.b16 %v932, %v928
      %v1025 = vpack.c.b16 %v933, %v929
      %v1026 = vpack.c.b16 %v934, %v930
      %v1027 = vpack.c.b16 %v939, %v935
      %v1028 = vpack.c.b16 %v940, %v936
      %v1029 = vpack.c.b16 %v941, %v937
      %v1030 = vpack.c.b16 %v942, %v938
      %v1031 = vpack.c.b16 %v947, %v943
      %v1032 = vpack.c.b16 %v948, %v944
      %v1033 = vpack.c.b16 %v949, %v945
      %v1034 = vpack.c.b16 %v950, %v946
      %v1035 = vpack.c.b16 %v955, %v951
      %v1036 = vpack.c.b16 %v956, %v952
      %v1037 = vpack.c.b16 %v957, %v953
      %v1038 = vpack.c.b16 %v958, %v954
      %v1039 = vpack.c.b16 %v963, %v959
      %v1040 = vpack.c.b16 %v964, %v960
      %v1041 = vpack.c.b16 %v965, %v961
      %v1042 = vpack.c.b16 %v966, %v962
      %v1043 = vpack.c.b16 %v971, %v967
      %v1044 = vpack.c.b16 %v972, %v968
      %v1045 = vpack.c.b16 %v973, %v969
      %v1046 = vpack.c.b16 %v974, %v970
      %v1047 = vpack.c.b16 %v979, %v975
      %v1048 = vpack.c.b16 %v980, %v976
      %v1049 = vpack.c.b16 %v981, %v977
      %v1050 = vpack.c.b16 %v982, %v978
      %v1051 = vpack.c.b16 %v987, %v983
      %v1052 = vpack.c.b16 %v988, %v984
      %v1053 = vpack.c.b16 %v989, %v985
      %v1054 = vpack.c.b16 %v990, %v986
      %1119 = vmatprep.subr.bf16.mxu0 0
      %1120 = vmatpush1.bf16.msra.mxu0 %v703
      %1121 = vmatprep.subr.bf16.mxu0 0
      %1122 = vmatpush1.bf16.msra.mxu0 %v704
      %1123 = vmatprep.subr.bf16.mxu0 0
      %1124 = vmatpush1.bf16.msra.mxu0 %v705
      %1125 = vmatprep.subr.bf16.mxu0 0
      %1126 = vmatpush1.bf16.msra.mxu0 %v706
      %1127 = vmatprep.subr.bf16.mxu0 0
      %1128 = vmatpush1.bf16.msra.mxu0 %v707
      %1129 = vmatprep.subr.bf16.mxu0 0
      %1130 = vmatpush1.bf16.msra.mxu0 %v708
      %1131 = vmatprep.subr.bf16.mxu0 0
      %1132 = vmatpush1.bf16.msra.mxu0 %v709
      %1133 = vmatprep.subr.bf16.mxu0 0
      %1134 = vmatpush1.bf16.msra.mxu0 %v710
      %1135 = vmatprep.subr.bf16.mxu0 0
      %1136 = vmatpush1.bf16.msra.mxu0 %v711
      %1137 = vmatprep.subr.bf16.mxu0 0
      %1138 = vmatpush1.bf16.msra.mxu0 %v712
      %1139 = vmatprep.subr.bf16.mxu0 0
      %1140 = vmatpush1.bf16.msra.mxu0 %v713
      %1141 = vmatprep.subr.bf16.mxu0 0
      %1142 = vmatpush1.bf16.msra.mxu0 %v714
      %1143 = vmatprep.subr.bf16.mxu0 0
      %1144 = vmatpush1.bf16.msra.mxu0 %v715
      %1145 = vmatprep.subr.bf16.mxu0 0
      %1146 = vmatpush1.bf16.msra.mxu0 %v716
      %1147 = vmatprep.subr.bf16.mxu0 0
      %1148 = vmatpush1.bf16.msra.mxu0 %v717
      %1149 = vmatprep.subr.bf16.mxu0 0
      %1150 = vmatpush1.bf16.msra.mxu0 %v718
      %1151 = vmatprep.mubr.bf16.mxu0 %v992
      %1152 = vmatmul.mubr.bf16.gmra.mrb[0].mxu0 %v991
      %v1153 = vpop.f32.mrb[0].mxu0
      %v1154 = vadd.f32 0.0, %v1153
      %v1155 = vpop.f32.mrb[0].mxu0
      %v1156 = vpop.f32.mrb[0].mxu0
      %v1157 = vadd.f32 0.0, %v1156
      %v1158 = vpop.f32.mrb[0].mxu0
      %1159 = vmatprep.mubr.bf16.mxu0 %v996
      %1160 = vmatmul.mubr.bf16.gmra.mrb[0].mxu0 %v995
      %v1161 = vpop.f32.mrb[0].mxu0
      %v1162 = vadd.f32 0.0, %v1161
      %v1163 = vpop.f32.mrb[0].mxu0
      %v1164 = vpop.f32.mrb[0].mxu0
      %v1165 = vadd.f32 0.0, %v1164
      %v1166 = vpop.f32.mrb[0].mxu0
      %1167 = vmatprep.mubr.bf16.mxu0 %v1000
      %1168 = vmatmul.mubr.bf16.gmra.mrb[0].mxu0 %v999
      %v1169 = vpop.f32.mrb[0].mxu0
      %v1170 = vadd.f32 0.0, %v1169
      %v1171 = vpop.f32.mrb[0].mxu0
      %v1172 = vpop.f32.mrb[0].mxu0
      %v1173 = vadd.f32 0.0, %v1172
      %v1174 = vpop.f32.mrb[0].mxu0
      %1175 = vmatprep.mubr.bf16.mxu0 %v1004
      %1176 = vmatmul.mubr.bf16.gmra.mrb[0].mxu0 %v1003
      %v1177 = vpop.f32.mrb[0].mxu0
      %v1178 = vadd.f32 0.0, %v1177
      %v1179 = vpop.f32.mrb[0].mxu0
      %v1180 = vpop.f32.mrb[0].mxu0
      %v1181 = vadd.f32 0.0, %v1180
      %v1182 = vpop.f32.mrb[0].mxu0
      %1183 = vmatprep.mubr.bf16.mxu0 %v1008
      %1184 = vmatmul.mubr.bf16.gmra.mrb[0].mxu0 %v1007
      %v1185 = vpop.f32.mrb[0].mxu0
      %v1186 = vadd.f32 0.0, %v1185
      %v1187 = vpop.f32.mrb[0].mxu0
      %v1188 = vpop.f32.mrb[0].mxu0
      %v1189 = vadd.f32 0.0, %v1188
      %v1190 = vpop.f32.mrb[0].mxu0
      %1191 = vmatprep.mubr.bf16.mxu0 %v1012
      %1192 = vmatmul.mubr.bf16.gmra.mrb[0].mxu0 %v1011
      %v1193 = vpop.f32.mrb[0].mxu0
      %v1194 = vadd.f32 0.0, %v1193
      %v1195 = vpop.f32.mrb[0].mxu0
      %v1196 = vpop.f32.mrb[0].mxu0
      %v1197 = vadd.f32 0.0, %v1196
      %v1198 = vpop.f32.mrb[0].mxu0
      %1199 = vmatprep.mubr.bf16.mxu0 %v1016
      %1200 = vmatmul.mubr.bf16.gmra.mrb[0].mxu0 %v1015
      %v1201 = vpop.f32.mrb[0].mxu0
      %v1202 = vadd.f32 0.0, %v1201
      %v1203 = vpop.f32.mrb[0].mxu0
      %v1204 = vpop.f32.mrb[0].mxu0
      %v1205 = vadd.f32 0.0, %v1204
      %v1206 = vpop.f32.mrb[0].mxu0
      %1207 = vmatprep.mubr.bf16.mxu0 %v1020
      %1208 = vmatmul.mubr.bf16.gmra.mrb[0].mxu0 %v1019
      %v1209 = vpop.f32.mrb[0].mxu0
      %v1210 = vadd.f32 0.0, %v1209
      %v1211 = vpop.f32.mrb[0].mxu0
      %v1212 = vpop.f32.mrb[0].mxu0
      %v1213 = vadd.f32 0.0, %v1212
      %v1214 = vpop.f32.mrb[0].mxu0
      %1215 = vmatprep.mubr.bf16.mxu0 %v1024
      %1216 = vmatmul.mubr.bf16.gmra.mrb[0].mxu0 %v1023
      %v1217 = vpop.f32.mrb[0].mxu0
      %v1218 = vadd.f32 0.0, %v1217
      %v1219 = vpop.f32.mrb[0].mxu0
      %v1220 = vpop.f32.mrb[0].mxu0
      %v1221 = vadd.f32 0.0, %v1220
      %v1222 = vpop.f32.mrb[0].mxu0
      %1223 = vmatprep.mubr.bf16.mxu0 %v1028
      %1224 = vmatmul.mubr.bf16.gmra.mrb[0].mxu0 %v1027
      %v1225 = vpop.f32.mrb[0].mxu0
      %v1226 = vadd.f32 0.0, %v1225
      %v1227 = vpop.f32.mrb[0].mxu0
      %v1228 = vpop.f32.mrb[0].mxu0
      %v1229 = vadd.f32 0.0, %v1228
      %v1230 = vpop.f32.mrb[0].mxu0
      %1231 = vmatprep.mubr.bf16.mxu0 %v1032
      %1232 = vmatmul.mubr.bf16.gmra.mrb[0].mxu0 %v1031
      %v1233 = vpop.f32.mrb[0].mxu0
      %v1234 = vadd.f32 0.0, %v1233
      %v1235 = vpop.f32.mrb[0].mxu0
      %v1236 = vpop.f32.mrb[0].mxu0
      %v1237 = vadd.f32 0.0, %v1236
      %v1238 = vpop.f32.mrb[0].mxu0
      %1239 = vmatprep.mubr.bf16.mxu0 %v1036
      %1240 = vmatmul.mubr.bf16.gmra.mrb[0].mxu0 %v1035
      %v1241 = vpop.f32.mrb[0].mxu0
      %v1242 = vadd.f32 0.0, %v1241
      %v1243 = vpop.f32.mrb[0].mxu0
      %v1244 = vpop.f32.mrb[0].mxu0
      %v1245 = vadd.f32 0.0, %v1244
      %v1246 = vpop.f32.mrb[0].mxu0
      %1247 = vmatprep.mubr.bf16.mxu0 %v1040
      %1248 = vmatmul.mubr.bf16.gmra.mrb[0].mxu0 %v1039
      %v1249 = vpop.f32.mrb[0].mxu0
      %v1250 = vadd.f32 0.0, %v1249
      %v1251 = vpop.f32.mrb[0].mxu0
      %v1252 = vpop.f32.mrb[0].mxu0
      %v1253 = vadd.f32 0.0, %v1252
      %v1254 = vpop.f32.mrb[0].mxu0
      %1255 = vmatprep.mubr.bf16.mxu0 %v1044
      %1256 = vmatmul.mubr.bf16.gmra.mrb[0].mxu0 %v1043
      %v1257 = vpop.f32.mrb[0].mxu0
      %v1258 = vadd.f32 0.0, %v1257
      %v1259 = vpop.f32.mrb[0].mxu0
      %v1260 = vpop.f32.mrb[0].mxu0
      %v1261 = vadd.f32 0.0, %v1260
      %v1262 = vpop.f32.mrb[0].mxu0
      %1263 = vmatprep.mubr.bf16.mxu0 %v1048
      %1264 = vmatmul.mubr.bf16.gmra.mrb[0].mxu0 %v1047
      %v1265 = vpop.f32.mrb[0].mxu0
      %v1266 = vadd.f32 0.0, %v1265
      %v1267 = vpop.f32.mrb[0].mxu0
      %v1268 = vpop.f32.mrb[0].mxu0
      %v1269 = vadd.f32 0.0, %v1268
      %v1270 = vpop.f32.mrb[0].mxu0
      %1271 = vmatprep.mubr.bf16.mxu0 %v1052
      %1272 = vmatmul.mubr.bf16.gmra.mrb[0].mxu0 %v1051
      %v1273 = vpop.f32.mrb[0].mxu0
      %v1274 = vadd.f32 0.0, %v1273
      %v1275 = vpop.f32.mrb[0].mxu0
      %v1276 = vpop.f32.mrb[0].mxu0
      %v1277 = vadd.f32 0.0, %v1276
      %v1278 = vpop.f32.mrb[0].mxu0
      %1279 = vdwg.mxu0
      %1280 = vmatprep.subr.bf16.mxu0 0
      %1281 = vmatpush1.bf16.msra.mxu0 %v719
      %1282 = vmatprep.subr.bf16.mxu0 0
      %1283 = vmatpush1.bf16.msra.mxu0 %v720
      %1284 = vmatprep.subr.bf16.mxu0 0
      %1285 = vmatpush1.bf16.msra.mxu0 %v721
      %1286 = vmatprep.subr.bf16.mxu0 0
      %1287 = vmatpush1.bf16.msra.mxu0 %v722
      %1288 = vmatprep.subr.bf16.mxu0 0
      %1289 = vmatpush1.bf16.msra.mxu0 %v723
      %1290 = vmatprep.subr.bf16.mxu0 0
      %1291 = vmatpush1.bf16.msra.mxu0 %v724
      %1292 = vmatprep.subr.bf16.mxu0 0
      %1293 = vmatpush1.bf16.msra.mxu0 %v725
      %1294 = vmatprep.subr.bf16.mxu0 0
      %1295 = vmatpush1.bf16.msra.mxu0 %v726
      %1296 = vmatprep.subr.bf16.mxu0 0
      %1297 = vmatpush1.bf16.msra.mxu0 %v727
      %1298 = vmatprep.subr.bf16.mxu0 0
      %1299 = vmatpush1.bf16.msra.mxu0 %v728
      %1300 = vmatprep.subr.bf16.mxu0 0
      %1301 = vmatpush1.bf16.msra.mxu0 %v729
      %1302 = vmatprep.subr.bf16.mxu0 0
      %1303 = vmatpush1.bf16.msra.mxu0 %v730
      %1304 = vmatprep.subr.bf16.mxu0 0
      %1305 = vmatpush1.bf16.msra.mxu0 %v731
      %1306 = vmatprep.subr.bf16.mxu0 0
      %1307 = vmatpush1.bf16.msra.mxu0 %v732
      %1308 = vmatprep.subr.bf16.mxu0 0
      %1309 = vmatpush1.bf16.msra.mxu0 %v733
      %1310 = vmatprep.subr.bf16.mxu0 0
      %1311 = vmatpush1.bf16.msra.mxu0 %v734
      %1312 = vmatprep.mubr.bf16.mxu0 %v994
      %1313 = vmatmul.mubr.bf16.gmra.mrb[0].mxu0 %v993
      %v1314 = vpop.f32.mrb[0].mxu0
      %v1315 = vadd.f32 %v1154, %v1314
      %v1316 = vpop.f32.mrb[0].mxu0
      %v1317 = vpop.f32.mrb[0].mxu0
      %v1318 = vadd.f32 %v1157, %v1317
      %v1319 = vpop.f32.mrb[0].mxu0
      %1320 = vmatprep.mubr.bf16.mxu0 %v998
      %1321 = vmatmul.mubr.bf16.gmra.mrb[0].mxu0 %v997
      %v1322 = vpop.f32.mrb[0].mxu0
      %v1323 = vadd.f32 %v1162, %v1322
      %v1324 = vpop.f32.mrb[0].mxu0
      %v1325 = vpop.f32.mrb[0].mxu0
      %v1326 = vadd.f32 %v1165, %v1325
      %v1327 = vpop.f32.mrb[0].mxu0
      %1328 = vmatprep.mubr.bf16.mxu0 %v1002
      %1329 = vmatmul.mubr.bf16.gmra.mrb[0].mxu0 %v1001
      %v1330 = vpop.f32.mrb[0].mxu0
      %v1331 = vadd.f32 %v1170, %v1330
      %v1332 = vpop.f32.mrb[0].mxu0
      %v1333 = vpop.f32.mrb[0].mxu0
      %v1334 = vadd.f32 %v1173, %v1333
      %v1335 = vpop.f32.mrb[0].mxu0
      %1336 = vmatprep.mubr.bf16.mxu0 %v1006
      %1337 = vmatmul.mubr.bf16.gmra.mrb[0].mxu0 %v1005
      %v1338 = vpop.f32.mrb[0].mxu0
      %v1339 = vadd.f32 %v1178, %v1338
      %v1340 = vpop.f32.mrb[0].mxu0
      %v1341 = vpop.f32.mrb[0].mxu0
      %v1342 = vadd.f32 %v1181, %v1341
      %v1343 = vpop.f32.mrb[0].mxu0
      %1344 = vmatprep.mubr.bf16.mxu0 %v1010
      %1345 = vmatmul.mubr.bf16.gmra.mrb[0].mxu0 %v1009
      %v1346 = vpop.f32.mrb[0].mxu0
      %v1347 = vadd.f32 %v1186, %v1346
      %v1348 = vpop.f32.mrb[0].mxu0
      %v1349 = vpop.f32.mrb[0].mxu0
      %v1350 = vadd.f32 %v1189, %v1349
      %v1351 = vpop.f32.mrb[0].mxu0
      %1352 = vmatprep.mubr.bf16.mxu0 %v1014
      %1353 = vmatmul.mubr.bf16.gmra.mrb[0].mxu0 %v1013
      %v1354 = vpop.f32.mrb[0].mxu0
      %v1355 = vadd.f32 %v1194, %v1354
      %v1356 = vpop.f32.mrb[0].mxu0
      %v1357 = vpop.f32.mrb[0].mxu0
      %v1358 = vadd.f32 %v1197, %v1357
      %v1359 = vpop.f32.mrb[0].mxu0
      %1360 = vmatprep.mubr.bf16.mxu0 %v1018
      %1361 = vmatmul.mubr.bf16.gmra.mrb[0].mxu0 %v1017
      %v1362 = vpop.f32.mrb[0].mxu0
      %v1363 = vadd.f32 %v1202, %v1362
      %v1364 = vpop.f32.mrb[0].mxu0
      %v1365 = vpop.f32.mrb[0].mxu0
      %v1366 = vadd.f32 %v1205, %v1365
      %v1367 = vpop.f32.mrb[0].mxu0
      %1368 = vmatprep.mubr.bf16.mxu0 %v1022
      %1369 = vmatmul.mubr.bf16.gmra.mrb[0].mxu0 %v1021
      %v1370 = vpop.f32.mrb[0].mxu0
      %v1371 = vadd.f32 %v1210, %v1370
      %v1372 = vpop.f32.mrb[0].mxu0
      %v1373 = vpop.f32.mrb[0].mxu0
      %v1374 = vadd.f32 %v1213, %v1373
      %v1375 = vpop.f32.mrb[0].mxu0
      %1376 = vmatprep.mubr.bf16.mxu0 %v1026
      %1377 = vmatmul.mubr.bf16.gmra.mrb[0].mxu0 %v1025
      %v1378 = vpop.f32.mrb[0].mxu0
      %v1379 = vadd.f32 %v1218, %v1378
      %v1380 = vpop.f32.mrb[0].mxu0
      %v1381 = vpop.f32.mrb[0].mxu0
      %v1382 = vadd.f32 %v1221, %v1381
      %v1383 = vpop.f32.mrb[0].mxu0
      %1384 = vmatprep.mubr.bf16.mxu0 %v1030
      %1385 = vmatmul.mubr.bf16.gmra.mrb[0].mxu0 %v1029
      %v1386 = vpop.f32.mrb[0].mxu0
      %v1387 = vadd.f32 %v1226, %v1386
      %v1388 = vpop.f32.mrb[0].mxu0
      %v1389 = vpop.f32.mrb[0].mxu0
      %v1390 = vadd.f32 %v1229, %v1389
      %v1391 = vpop.f32.mrb[0].mxu0
      %1392 = vmatprep.mubr.bf16.mxu0 %v1034
      %1393 = vmatmul.mubr.bf16.gmra.mrb[0].mxu0 %v1033
      %v1394 = vpop.f32.mrb[0].mxu0
      %v1395 = vadd.f32 %v1234, %v1394
      %v1396 = vpop.f32.mrb[0].mxu0
      %v1397 = vpop.f32.mrb[0].mxu0
      %v1398 = vadd.f32 %v1237, %v1397
      %v1399 = vpop.f32.mrb[0].mxu0
      %1400 = vmatprep.mubr.bf16.mxu0 %v1038
      %1401 = vmatmul.mubr.bf16.gmra.mrb[0].mxu0 %v1037
      %v1402 = vpop.f32.mrb[0].mxu0
      %v1403 = vadd.f32 %v1242, %v1402
      %v1404 = vpop.f32.mrb[0].mxu0
      %v1405 = vpop.f32.mrb[0].mxu0
      %v1406 = vadd.f32 %v1245, %v1405
      %v1407 = vpop.f32.mrb[0].mxu0
      %1408 = vmatprep.mubr.bf16.mxu0 %v1042
      %1409 = vmatmul.mubr.bf16.gmra.mrb[0].mxu0 %v1041
      %v1410 = vpop.f32.mrb[0].mxu0
      %v1411 = vadd.f32 %v1250, %v1410
      %v1412 = vpop.f32.mrb[0].mxu0
      %v1413 = vpop.f32.mrb[0].mxu0
      %v1414 = vadd.f32 %v1253, %v1413
      %v1415 = vpop.f32.mrb[0].mxu0
      %1416 = vmatprep.mubr.bf16.mxu0 %v1046
      %1417 = vmatmul.mubr.bf16.gmra.mrb[0].mxu0 %v1045
      %v1418 = vpop.f32.mrb[0].mxu0
      %v1419 = vadd.f32 %v1258, %v1418
      %v1420 = vpop.f32.mrb[0].mxu0
      %v1421 = vpop.f32.mrb[0].mxu0
      %v1422 = vadd.f32 %v1261, %v1421
      %v1423 = vpop.f32.mrb[0].mxu0
      %1424 = vmatprep.mubr.bf16.mxu0 %v1050
      %1425 = vmatmul.mubr.bf16.gmra.mrb[0].mxu0 %v1049
      %v1426 = vpop.f32.mrb[0].mxu0
      %v1427 = vadd.f32 %v1266, %v1426
      %v1428 = vpop.f32.mrb[0].mxu0
      %v1429 = vpop.f32.mrb[0].mxu0
      %v1430 = vadd.f32 %v1269, %v1429
      %v1431 = vpop.f32.mrb[0].mxu0
      %1432 = vmatprep.mubr.bf16.mxu0 %v1054
      %1433 = vmatmul.mubr.bf16.gmra.mrb[0].mxu0 %v1053
      %v1434 = vpop.f32.mrb[0].mxu0
      %v1435 = vadd.f32 %v1274, %v1434
      %v1436 = vpop.f32.mrb[0].mxu0
      %v1437 = vpop.f32.mrb[0].mxu0
      %v1438 = vadd.f32 %v1277, %v1437
      %v1439 = vpop.f32.mrb[0].mxu0
      %1440 = vdwg.mxu0
      %v1441 = vpack.c.bf16 %v1318, %v1315
      %v1442 = vpack.c.bf16 %v1326, %v1323
      %v1443 = vpack.c.bf16 %v1334, %v1331
      %v1444 = vpack.c.bf16 %v1342, %v1339
      %v1445 = vpack.c.bf16 %v1350, %v1347
      %v1446 = vpack.c.bf16 %v1358, %v1355
      %v1447 = vpack.c.bf16 %v1366, %v1363
      %v1448 = vpack.c.bf16 %v1374, %v1371
      %v1449 = vpack.c.bf16 %v1382, %v1379
      %v1450 = vpack.c.bf16 %v1390, %v1387
      %v1451 = vpack.c.bf16 %v1398, %v1395
      %v1452 = vpack.c.bf16 %v1406, %v1403
      %v1453 = vpack.c.bf16 %v1414, %v1411
      %v1454 = vpack.c.bf16 %v1422, %v1419
      %v1455 = vpack.c.bf16 %v1430, %v1427
      %v1456 = vpack.c.bf16 %v1438, %v1435
      %v1457 = vld [vmem:[#allocation9] sm:$0xf]
      %v1458 = vld [vmem:[#allocation9 + $0x4] sm:$0xf]
      %v1459 = vld [vmem:[#allocation9 + $0x8] sm:$0xf]
      %v1460 = vld [vmem:[#allocation9 + $0xc] sm:$0xf]
      %v1461 = vld [vmem:[#allocation9 + $0x10] sm:$0xf]
      %v1462 = vld [vmem:[#allocation9 + $0x14] sm:$0xf]
      %v1463 = vld [vmem:[#allocation9 + $0x18] sm:$0xf]
      %v1464 = vld [vmem:[#allocation9 + $0x1c] sm:$0xf]
      %v1465 = vld [vmem:[#allocation9 + $0x20] sm:$0xf]
      %v1466 = vld [vmem:[#allocation9 + $0x24] sm:$0xf]
      %v1467 = vld [vmem:[#allocation9 + $0x28] sm:$0xf]
      %v1468 = vld [vmem:[#allocation9 + $0x2c] sm:$0xf]
      %v1469 = vld [vmem:[#allocation9 + $0x30] sm:$0xf]
      %v1470 = vld [vmem:[#allocation9 + $0x34] sm:$0xf]
      %v1471 = vld [vmem:[#allocation9 + $0x38] sm:$0xf]
      %v1472 = vld [vmem:[#allocation9 + $0x3c] sm:$0xf]
      %v1489 = vunpack.c.l.b16 %v1457
      %v1490 = vunpack.c.l.b16 %v1458
      %v1491 = vunpack.c.l.b16 %v1459
      %v1492 = vunpack.c.l.b16 %v1460
      %v1493 = vunpack.c.l.b16 %v1461
      %v1494 = vunpack.c.l.b16 %v1462
      %v1495 = vunpack.c.l.b16 %v1463
      %v1496 = vunpack.c.l.b16 %v1464
      %v1497 = vunpack.c.l.b16 %v1465
      %v1498 = vunpack.c.l.b16 %v1466
      %v1499 = vunpack.c.l.b16 %v1467
      %v1500 = vunpack.c.l.b16 %v1468
      %v1501 = vunpack.c.l.b16 %v1469
      %v1502 = vunpack.c.l.b16 %v1470
      %v1503 = vunpack.c.l.b16 %v1471
      %v1504 = vunpack.c.l.b16 %v1472
      %v1505 = vpack.c.b16 %v1490, %v1489
      %v1506 = vpack.c.b16 %v1492, %v1491
      %v1507 = vpack.c.b16 %v1494, %v1493
      %v1508 = vpack.c.b16 %v1496, %v1495
      %v1509 = vpack.c.b16 %v1498, %v1497
      %v1510 = vpack.c.b16 %v1500, %v1499
      %v1511 = vpack.c.b16 %v1502, %v1501
      %v1512 = vpack.c.b16 %v1504, %v1503
      %1521 = vmatprep.subr.bf16.mxu0 0
      %1522 = vmatpush1.bf16.msra.mxu0 %v1505
      %1523 = vmatprep.subr.bf16.mxu0 0
      %1524 = vmatpush1.bf16.msra.mxu0 %v1506
      %1525 = vmatprep.subr.bf16.mxu0 0
      %1526 = vmatpush1.bf16.msra.mxu0 %v1507
      %1527 = vmatprep.subr.bf16.mxu0 0
      %1528 = vmatpush1.bf16.msra.mxu0 %v1508
      %1529 = vmatprep.subr.bf16.mxu0 0
      %1530 = vmatpush1.bf16.msra.mxu0 %v1509
      %1531 = vmatprep.subr.bf16.mxu0 0
      %1532 = vmatpush1.bf16.msra.mxu0 %v1510
      %1533 = vmatprep.subr.bf16.mxu0 0
      %1534 = vmatpush1.bf16.msra.mxu0 %v1511
      %1535 = vmatprep.subr.bf16.mxu0 0
      %1536 = vmatpush1.bf16.msra.mxu0 %v1512
      %1537 = vmatprep.subr.bf16.mxu0 0
      %1538 = vmatpush1.bf16.msra.mxu0 0
      %1539 = vmatprep.subr.bf16.mxu0 0
      %1540 = vmatpush1.bf16.msra.mxu0 0
      %1541 = vmatprep.subr.bf16.mxu0 0
      %1542 = vmatpush1.bf16.msra.mxu0 0
      %1543 = vmatprep.subr.bf16.mxu0 0
      %1544 = vmatpush1.bf16.msra.mxu0 0
      %1545 = vmatprep.subr.bf16.mxu0 0
      %1546 = vmatpush1.bf16.msra.mxu0 0
      %1547 = vmatprep.subr.bf16.mxu0 0
      %1548 = vmatpush1.bf16.msra.mxu0 0
      %1549 = vmatprep.subr.bf16.mxu0 0
      %1550 = vmatpush1.bf16.msra.mxu0 0
      %1551 = vmatprep.subr.bf16.mxu0 0
      %1552 = vmatpush1.bf16.msra.mxu0 0
      %1553 = vmatprep.mubr.bf16.mxu0 0
      %1554 = vmatmul.mubr.bf16.gmra.mrb[0].mxu0 %v1441
      %v1555 = vpop.f32.mrb[0].mxu0
      %v1556 = vadd.f32 0.0, %v1555
      %v1557 = vpop.f32.mrb[0].mxu0
      %v1558 = vpop.f32.mrb[0].mxu0
      %v1559 = vadd.f32 0.0, %v1558
      %v1560 = vpop.f32.mrb[0].mxu0
      %1561 = vmatprep.mubr.bf16.mxu0 0
      %1562 = vmatmul.mubr.bf16.gmra.mrb[0].mxu0 %v1442
      %v1563 = vpop.f32.mrb[0].mxu0
      %v1564 = vadd.f32 0.0, %v1563
      %v1565 = vpop.f32.mrb[0].mxu0
      %v1566 = vpop.f32.mrb[0].mxu0
      %v1567 = vadd.f32 0.0, %v1566
      %v1568 = vpop.f32.mrb[0].mxu0
      %1569 = vmatprep.mubr.bf16.mxu0 0
      %1570 = vmatmul.mubr.bf16.gmra.mrb[0].mxu0 %v1443
      %v1571 = vpop.f32.mrb[0].mxu0
      %v1572 = vadd.f32 0.0, %v1571
      %v1573 = vpop.f32.mrb[0].mxu0
      %v1574 = vpop.f32.mrb[0].mxu0
      %v1575 = vadd.f32 0.0, %v1574
      %v1576 = vpop.f32.mrb[0].mxu0
      %1577 = vmatprep.mubr.bf16.mxu0 0
      %1578 = vmatmul.mubr.bf16.gmra.mrb[0].mxu0 %v1444
      %v1579 = vpop.f32.mrb[0].mxu0
      %v1580 = vadd.f32 0.0, %v1579
      %v1581 = vpop.f32.mrb[0].mxu0
      %v1582 = vpop.f32.mrb[0].mxu0
      %v1583 = vadd.f32 0.0, %v1582
      %v1584 = vpop.f32.mrb[0].mxu0
      %1585 = vmatprep.mubr.bf16.mxu0 0
      %1586 = vmatmul.mubr.bf16.gmra.mrb[0].mxu0 %v1445
      %v1587 = vpop.f32.mrb[0].mxu0
      %v1588 = vadd.f32 0.0, %v1587
      %v1589 = vpop.f32.mrb[0].mxu0
      %v1590 = vpop.f32.mrb[0].mxu0
      %v1591 = vadd.f32 0.0, %v1590
      %v1592 = vpop.f32.mrb[0].mxu0
      %1593 = vmatprep.mubr.bf16.mxu0 0
      %1594 = vmatmul.mubr.bf16.gmra.mrb[0].mxu0 %v1446
      %v1595 = vpop.f32.mrb[0].mxu0
      %v1596 = vadd.f32 0.0, %v1595
      %v1597 = vpop.f32.mrb[0].mxu0
      %v1598 = vpop.f32.mrb[0].mxu0
      %v1599 = vadd.f32 0.0, %v1598
      %v1600 = vpop.f32.mrb[0].mxu0
      %1601 = vmatprep.mubr.bf16.mxu0 0
      %1602 = vmatmul.mubr.bf16.gmra.mrb[0].mxu0 %v1447
      %v1603 = vpop.f32.mrb[0].mxu0
      %v1604 = vadd.f32 0.0, %v1603
      %v1605 = vpop.f32.mrb[0].mxu0
      %v1606 = vpop.f32.mrb[0].mxu0
      %v1607 = vadd.f32 0.0, %v1606
      %v1608 = vpop.f32.mrb[0].mxu0
      %1609 = vmatprep.mubr.bf16.mxu0 0
      %1610 = vmatmul.mubr.bf16.gmra.mrb[0].mxu0 %v1448
      %v1611 = vpop.f32.mrb[0].mxu0
      %v1612 = vadd.f32 0.0, %v1611
      %v1613 = vpop.f32.mrb[0].mxu0
      %v1614 = vpop.f32.mrb[0].mxu0
      %v1615 = vadd.f32 0.0, %v1614
      %v1616 = vpop.f32.mrb[0].mxu0
      %1617 = vmatprep.mubr.bf16.mxu0 0
      %1618 = vmatmul.mubr.bf16.gmra.mrb[0].mxu0 %v1449
      %v1619 = vpop.f32.mrb[0].mxu0
      %v1620 = vadd.f32 0.0, %v1619
      %v1621 = vpop.f32.mrb[0].mxu0
      %v1622 = vpop.f32.mrb[0].mxu0
      %v1623 = vadd.f32 0.0, %v1622
      %v1624 = vpop.f32.mrb[0].mxu0
      %1625 = vmatprep.mubr.bf16.mxu0 0
      %1626 = vmatmul.mubr.bf16.gmra.mrb[0].mxu0 %v1450
      %v1627 = vpop.f32.mrb[0].mxu0
      %v1628 = vadd.f32 0.0, %v1627
      %v1629 = vpop.f32.mrb[0].mxu0
      %v1630 = vpop.f32.mrb[0].mxu0
      %v1631 = vadd.f32 0.0, %v1630
      %v1632 = vpop.f32.mrb[0].mxu0
      %1633 = vmatprep.mubr.bf16.mxu0 0
      %1634 = vmatmul.mubr.bf16.gmra.mrb[0].mxu0 %v1451
      %v1635 = vpop.f32.mrb[0].mxu0
      %v1636 = vadd.f32 0.0, %v1635
      %v1637 = vpop.f32.mrb[0].mxu0
      %v1638 = vpop.f32.mrb[0].mxu0
      %v1639 = vadd.f32 0.0, %v1638
      %v1640 = vpop.f32.mrb[0].mxu0
      %1641 = vmatprep.mubr.bf16.mxu0 0
      %1642 = vmatmul.mubr.bf16.gmra.mrb[0].mxu0 %v1452
      %v1643 = vpop.f32.mrb[0].mxu0
      %v1644 = vadd.f32 0.0, %v1643
      %v1645 = vpop.f32.mrb[0].mxu0
      %v1646 = vpop.f32.mrb[0].mxu0
      %v1647 = vadd.f32 0.0, %v1646
      %v1648 = vpop.f32.mrb[0].mxu0
      %1649 = vmatprep.mubr.bf16.mxu0 0
      %1650 = vmatmul.mubr.bf16.gmra.mrb[0].mxu0 %v1453
      %v1651 = vpop.f32.mrb[0].mxu0
      %v1652 = vadd.f32 0.0, %v1651
      %v1653 = vpop.f32.mrb[0].mxu0
      %v1654 = vpop.f32.mrb[0].mxu0
      %v1655 = vadd.f32 0.0, %v1654
      %v1656 = vpop.f32.mrb[0].mxu0
      %1657 = vmatprep.mubr.bf16.mxu0 0
      %1658 = vmatmul.mubr.bf16.gmra.mrb[0].mxu0 %v1454
      %v1659 = vpop.f32.mrb[0].mxu0
      %v1660 = vadd.f32 0.0, %v1659
      %v1661 = vpop.f32.mrb[0].mxu0
      %v1662 = vpop.f32.mrb[0].mxu0
      %v1663 = vadd.f32 0.0, %v1662
      %v1664 = vpop.f32.mrb[0].mxu0
      %1665 = vmatprep.mubr.bf16.mxu0 0
      %1666 = vmatmul.mubr.bf16.gmra.mrb[0].mxu0 %v1455
      %v1667 = vpop.f32.mrb[0].mxu0
      %v1668 = vadd.f32 0.0, %v1667
      %v1669 = vpop.f32.mrb[0].mxu0
      %v1670 = vpop.f32.mrb[0].mxu0
      %v1671 = vadd.f32 0.0, %v1670
      %v1672 = vpop.f32.mrb[0].mxu0
      %1673 = vmatprep.mubr.bf16.mxu0 0
      %1674 = vmatmul.mubr.bf16.gmra.mrb[0].mxu0 %v1456
      %v1675 = vpop.f32.mrb[0].mxu0
      %v1676 = vadd.f32 0.0, %v1675
      %v1677 = vpop.f32.mrb[0].mxu0
      %v1678 = vpop.f32.mrb[0].mxu0
      %v1679 = vadd.f32 0.0, %v1678
      %v1680 = vpop.f32.mrb[0].mxu0
      %1681 = vdwg.mxu0
      %v1682 = vpack.c.bf16 %v1559, %v1556
      %v1683 = vpack.c.bf16 %v1567, %v1564
      %v1684 = vpack.c.bf16 %v1575, %v1572
      %v1685 = vpack.c.bf16 %v1583, %v1580
      %v1686 = vpack.c.bf16 %v1591, %v1588
      %v1687 = vpack.c.bf16 %v1599, %v1596
      %v1688 = vpack.c.bf16 %v1607, %v1604
      %v1689 = vpack.c.bf16 %v1615, %v1612
      %v1690 = vpack.c.bf16 %v1623, %v1620
      %v1691 = vpack.c.bf16 %v1631, %v1628
      %v1692 = vpack.c.bf16 %v1639, %v1636
      %v1693 = vpack.c.bf16 %v1647, %v1644
      %v1694 = vpack.c.bf16 %v1655, %v1652
      %v1695 = vpack.c.bf16 %v1663, %v1660
      %v1696 = vpack.c.bf16 %v1671, %v1668
      %v1697 = vpack.c.bf16 %v1679, %v1676
      %1698 = vst [vmem:[#allocation2] sm:$0xff] %v1682
      %1699 = vst [vmem:[#allocation2 + $0x8] sm:$0xff] %v1683
      %1700 = vst [vmem:[#allocation2 + $0x10] sm:$0xff] %v1684
      %1701 = vst [vmem:[#allocation2 + $0x18] sm:$0xff] %v1685
      %1702 = vst [vmem:[#allocation2 + $0x20] sm:$0xff] %v1686
      %1703 = vst [vmem:[#allocation2 + $0x28] sm:$0xff] %v1687
      %1704 = vst [vmem:[#allocation2 + $0x30] sm:$0xff] %v1688
      %1705 = vst [vmem:[#allocation2 + $0x38] sm:$0xff] %v1689
      %1706 = vst [vmem:[#allocation2 + $0x40] sm:$0xff] %v1690
      %1707 = vst [vmem:[#allocation2 + $0x48] sm:$0xff] %v1691
      %1708 = vst [vmem:[#allocation2 + $0x50] sm:$0xff] %v1692
      %1709 = vst [vmem:[#allocation2 + $0x58] sm:$0xff] %v1693
      %1710 = vst [vmem:[#allocation2 + $0x60] sm:$0xff] %v1694
      %1711 = vst [vmem:[#allocation2 + $0x68] sm:$0xff] %v1695
      %1712 = vst [vmem:[#allocation2 + $0x70] sm:$0xff] %v1696
      %1713 = vst [vmem:[#allocation2 + $0x78] sm:$0xff] %v1697
    $region45: #{tpu_custom_call.1} parent=1 // pred_fallthru
      _
    %v1714 = vld [vmem:[#allocation11] sm:$0xff]
    %v1715 = vld [vmem:[#allocation11 + $0x8] sm:$0xff]
    %v1716 = vld [vmem:[#allocation11 + $0x10] sm:$0xff]
    %v1717 = vld [vmem:[#allocation11 + $0x18] sm:$0xff]
    %v1718 = vld [vmem:[#allocation11 + $0x20] sm:$0xff]
    %v1719 = vld [vmem:[#allocation11 + $0x28] sm:$0xff]
    %v1720 = vld [vmem:[#allocation11 + $0x30] sm:$0xff]
    %v1721 = vld [vmem:[#allocation11 + $0x38] sm:$0xff]
    %v1722 = vld [vmem:[#allocation11 + $0x40] sm:$0xff]
    %v1723 = vld [vmem:[#allocation11 + $0x48] sm:$0xff]
    %v1724 = vld [vmem:[#allocation11 + $0x50] sm:$0xff]
    %v1725 = vld [vmem:[#allocation11 + $0x58] sm:$0xff]
    %v1726 = vld [vmem:[#allocation11 + $0x60] sm:$0xff]
    %v1727 = vld [vmem:[#allocation11 + $0x68] sm:$0xff]
    %v1728 = vld [vmem:[#allocation11 + $0x70] sm:$0xff]
    %v1729 = vld [vmem:[#allocation11 + $0x78] sm:$0xff]
    %v1730 = vld [vmem:[#allocation2] sm:$0xff]
    %v1731 = vld [vmem:[#allocation2 + $0x8] sm:$0xff]
    %v1732 = vld [vmem:[#allocation2 + $0x10] sm:$0xff]
    %v1733 = vld [vmem:[#allocation2 + $0x18] sm:$0xff]
    %v1734 = vld [vmem:[#allocation2 + $0x20] sm:$0xff]
    %v1735 = vld [vmem:[#allocation2 + $0x28] sm:$0xff]
    %v1736 = vld [vmem:[#allocation2 + $0x30] sm:$0xff]
    %v1737 = vld [vmem:[#allocation2 + $0x38] sm:$0xff]
    %v1738 = vld [vmem:[#allocation2 + $0x40] sm:$0xff]
    %v1739 = vld [vmem:[#allocation2 + $0x48] sm:$0xff]
    %v1740 = vld [vmem:[#allocation2 + $0x50] sm:$0xff]
    %v1741 = vld [vmem:[#allocation2 + $0x58] sm:$0xff]
    %v1742 = vld [vmem:[#allocation2 + $0x60] sm:$0xff]
    %v1743 = vld [vmem:[#allocation2 + $0x68] sm:$0xff]
    %v1744 = vld [vmem:[#allocation2 + $0x70] sm:$0xff]
    %v1745 = vld [vmem:[#allocation2 + $0x78] sm:$0xff]
    %v1762 = vunpack.c.l.b16 %v1714
    %v1763 = vunpack.c.h.b16 %v1714
    %v1764 = vunpack.c.l.b16 %v1715
    %v1765 = vunpack.c.h.b16 %v1715
    %v1766 = vunpack.c.l.b16 %v1716
    %v1767 = vunpack.c.h.b16 %v1716
    %v1768 = vunpack.c.l.b16 %v1717
    %v1769 = vunpack.c.h.b16 %v1717
    %v1770 = vunpack.c.l.b16 %v1718
    %v1771 = vunpack.c.h.b16 %v1718
    %v1772 = vunpack.c.l.b16 %v1719
    %v1773 = vunpack.c.h.b16 %v1719
    %v1774 = vunpack.c.l.b16 %v1720
    %v1775 = vunpack.c.h.b16 %v1720
    %v1776 = vunpack.c.l.b16 %v1721
    %v1777 = vunpack.c.h.b16 %v1721
    %v1778 = vunpack.c.l.b16 %v1722
    %v1779 = vunpack.c.h.b16 %v1722
    %v1780 = vunpack.c.l.b16 %v1723
    %v1781 = vunpack.c.h.b16 %v1723
    %v1782 = vunpack.c.l.b16 %v1724
    %v1783 = vunpack.c.h.b16 %v1724
    %v1784 = vunpack.c.l.b16 %v1725
    %v1785 = vunpack.c.h.b16 %v1725
    %v1786 = vunpack.c.l.b16 %v1726
    %v1787 = vunpack.c.h.b16 %v1726
    %v1788 = vunpack.c.l.b16 %v1727
    %v1789 = vunpack.c.h.b16 %v1727
    %v1790 = vunpack.c.l.b16 %v1728
    %v1791 = vunpack.c.h.b16 %v1728
    %v1792 = vunpack.c.l.b16 %v1729
    %v1793 = vunpack.c.h.b16 %v1729
    %v1794 = vpack.c.b16 %v1764, %v1762
    %v1795 = vpack.c.b16 %v1765, %v1763
    %v1796 = vpack.c.b16 %v1768, %v1766
    %v1797 = vpack.c.b16 %v1769, %v1767
    %v1798 = vpack.c.b16 %v1772, %v1770
    %v1799 = vpack.c.b16 %v1773, %v1771
    %v1800 = vpack.c.b16 %v1776, %v1774
    %v1801 = vpack.c.b16 %v1777, %v1775
    %v1802 = vpack.c.b16 %v1780, %v1778
    %v1803 = vpack.c.b16 %v1781, %v1779
    %v1804 = vpack.c.b16 %v1784, %v1782
    %v1805 = vpack.c.b16 %v1785, %v1783
    %v1806 = vpack.c.b16 %v1788, %v1786
    %v1807 = vpack.c.b16 %v1789, %v1787
    %v1808 = vpack.c.b16 %v1792, %v1790
    %v1809 = vpack.c.b16 %v1793, %v1791
    %1826 = vmatprep.subr.bf16.mxu0 0
    %1827 = vmatpush1.bf16.msra.mxu0 %v1730
    %1828 = vmatprep.subr.bf16.mxu0 0
    %1829 = vmatpush1.bf16.msra.mxu0 %v1731
    %1830 = vmatprep.subr.bf16.mxu0 0
    %1831 = vmatpush1.bf16.msra.mxu0 %v1732
    %1832 = vmatprep.subr.bf16.mxu0 0
    %1833 = vmatpush1.bf16.msra.mxu0 %v1733
    %1834 = vmatprep.subr.bf16.mxu0 0
    %1835 = vmatpush1.bf16.msra.mxu0 %v1734
    %1836 = vmatprep.subr.bf16.mxu0 0
    %1837 = vmatpush1.bf16.msra.mxu0 %v1735
    %1838 = vmatprep.subr.bf16.mxu0 0
    %1839 = vmatpush1.bf16.msra.mxu0 %v1736
    %1840 = vmatprep.subr.bf16.mxu0 0
    %1841 = vmatpush1.bf16.msra.mxu0 %v1737
    %1842 = vmatprep.subr.bf16.mxu0 0
    %1843 = vmatpush1.bf16.msra.mxu0 %v1738
    %1844 = vmatprep.subr.bf16.mxu0 0
    %1845 = vmatpush1.bf16.msra.mxu0 %v1739
    %1846 = vmatprep.subr.bf16.mxu0 0
    %1847 = vmatpush1.bf16.msra.mxu0 %v1740
    %1848 = vmatprep.subr.bf16.mxu0 0
    %1849 = vmatpush1.bf16.msra.mxu0 %v1741
    %1850 = vmatprep.subr.bf16.mxu0 0
    %1851 = vmatpush1.bf16.msra.mxu0 %v1742
    %1852 = vmatprep.subr.bf16.mxu0 0
    %1853 = vmatpush1.bf16.msra.mxu0 %v1743
    %1854 = vmatprep.subr.bf16.mxu0 0
    %1855 = vmatpush1.bf16.msra.mxu0 %v1744
    %1856 = vmatprep.subr.bf16.mxu0 0
    %1857 = vmatpush1.bf16.msra.mxu0 %v1745
    %1858 = vmatprep.mubr.bf16.mxu0 %v1795
    %1859 = vmatmul.mubr.bf16.gmra.mrb[0].mxu0 %v1794
    %v1860 = vpop.f32.mrb[0].mxu0
    %v1861 = vadd.f32 0.0, %v1860
    %v1862 = vpop.f32.mrb[0].mxu0
    %v1863 = vpop.f32.mrb[0].mxu0
    %v1864 = vadd.f32 0.0, %v1863
    %v1865 = vpop.f32.mrb[0].mxu0
    %1866 = vmatprep.mubr.bf16.mxu0 %v1797
    %1867 = vmatmul.mubr.bf16.gmra.mrb[0].mxu0 %v1796
    %v1868 = vpop.f32.mrb[0].mxu0
    %v1869 = vadd.f32 0.0, %v1868
    %v1870 = vpop.f32.mrb[0].mxu0
    %v1871 = vpop.f32.mrb[0].mxu0
    %v1872 = vadd.f32 0.0, %v1871
    %v1873 = vpop.f32.mrb[0].mxu0
    %1874 = vmatprep.mubr.bf16.mxu0 %v1799
    %1875 = vmatmul.mubr.bf16.gmra.mrb[0].mxu0 %v1798
    %v1876 = vpop.f32.mrb[0].mxu0
    %v1877 = vadd.f32 0.0, %v1876
    %v1878 = vpop.f32.mrb[0].mxu0
    %v1879 = vpop.f32.mrb[0].mxu0
    %v1880 = vadd.f32 0.0, %v1879
    %v1881 = vpop.f32.mrb[0].mxu0
    %1882 = vmatprep.mubr.bf16.mxu0 %v1801
    %1883 = vmatmul.mubr.bf16.gmra.mrb[0].mxu0 %v1800
    %v1884 = vpop.f32.mrb[0].mxu0
    %v1885 = vadd.f32 0.0, %v1884
    %v1886 = vpop.f32.mrb[0].mxu0
    %v1887 = vpop.f32.mrb[0].mxu0
    %v1888 = vadd.f32 0.0, %v1887
    %v1889 = vpop.f32.mrb[0].mxu0
    %1890 = vmatprep.mubr.bf16.mxu0 %v1803
    %1891 = vmatmul.mubr.bf16.gmra.mrb[0].mxu0 %v1802
    %v1892 = vpop.f32.mrb[0].mxu0
    %v1893 = vadd.f32 0.0, %v1892
    %v1894 = vpop.f32.mrb[0].mxu0
    %v1895 = vpop.f32.mrb[0].mxu0
    %v1896 = vadd.f32 0.0, %v1895
    %v1897 = vpop.f32.mrb[0].mxu0
    %1898 = vmatprep.mubr.bf16.mxu0 %v1805
    %1899 = vmatmul.mubr.bf16.gmra.mrb[0].mxu0 %v1804
    %v1900 = vpop.f32.mrb[0].mxu0
    %v1901 = vadd.f32 0.0, %v1900
    %v1902 = vpop.f32.mrb[0].mxu0
    %v1903 = vpop.f32.mrb[0].mxu0
    %v1904 = vadd.f32 0.0, %v1903
    %v1905 = vpop.f32.mrb[0].mxu0
    %1906 = vmatprep.mubr.bf16.mxu0 %v1807
    %1907 = vmatmul.mubr.bf16.gmra.mrb[0].mxu0 %v1806
    %v1908 = vpop.f32.mrb[0].mxu0
    %v1909 = vadd.f32 0.0, %v1908
    %v1910 = vpop.f32.mrb[0].mxu0
    %v1911 = vpop.f32.mrb[0].mxu0
    %v1912 = vadd.f32 0.0, %v1911
    %v1913 = vpop.f32.mrb[0].mxu0
    %1914 = vmatprep.mubr.bf16.mxu0 %v1809
    %1915 = vmatmul.mubr.bf16.gmra.mrb[0].mxu0 %v1808
    %v1916 = vpop.f32.mrb[0].mxu0
    %v1917 = vadd.f32 0.0, %v1916
    %v1918 = vpop.f32.mrb[0].mxu0
    %v1919 = vpop.f32.mrb[0].mxu0
    %v1920 = vadd.f32 0.0, %v1919
    %v1921 = vpop.f32.mrb[0].mxu0
    %1922 = vdwg.mxu0
    %v1923 = vlaneseq
    %v1924 = vand.u32 %v1923, 127
    %vm1925 = vcmp.lt.s32.totalorder %v1924, 10
    %v1926 = vsel %vm1925, %v1861, -1e+30
    %v1927 = vsel %vm1925, %v1864, -1e+30
    %v1928 = vsel %vm1925, %v1869, -1e+30
    %v1929 = vsel %vm1925, %v1872, -1e+30
    %v1930 = vsel %vm1925, %v1877, -1e+30
    %v1931 = vsel %vm1925, %v1880, -1e+30
    %v1932 = vsel %vm1925, %v1885, -1e+30
    %v1933 = vsel %vm1925, %v1888, -1e+30
    %v1934 = vsel %vm1925, %v1893, -1e+30
    %v1935 = vsel %vm1925, %v1896, -1e+30
    %v1936 = vsel %vm1925, %v1901, -1e+30
    %v1937 = vsel %vm1925, %v1904, -1e+30
    %v1938 = vsel %vm1925, %v1909, -1e+30
    %v1939 = vsel %vm1925, %v1912, -1e+30
    %v1940 = vsel %vm1925, %v1917, -1e+30
    %v1941 = vsel %vm1925, %v1920, -1e+30
    %1942 = vmax.xlane.f32.xlu0 %v1926
    %v1943 = vpop.xlane.xlu0 %1942
    %1944 = vmax.xlane.f32.xlu0 %v1927
    %v1945 = vpop.xlane.xlu0 %1944
    %1946 = vmax.xlane.f32.xlu0 %v1928
    %v1947 = vpop.xlane.xlu0 %1946
    %1948 = vmax.xlane.f32.xlu0 %v1929
    %v1949 = vpop.xlane.xlu0 %1948
    %1950 = vmax.xlane.f32.xlu0 %v1930
    %v1951 = vpop.xlane.xlu0 %1950
    %1952 = vmax.xlane.f32.xlu0 %v1931
    %v1953 = vpop.xlane.xlu0 %1952
    %1954 = vmax.xlane.f32.xlu0 %v1932
    %v1955 = vpop.xlane.xlu0 %1954
    %1956 = vmax.xlane.f32.xlu0 %v1933
    %v1957 = vpop.xlane.xlu0 %1956
    %1958 = vmax.xlane.f32.xlu0 %v1934
    %v1959 = vpop.xlane.xlu0 %1958
    %1960 = vmax.xlane.f32.xlu0 %v1935
    %v1961 = vpop.xlane.xlu0 %1960
    %1962 = vmax.xlane.f32.xlu0 %v1936
    %v1963 = vpop.xlane.xlu0 %1962
    %1964 = vmax.xlane.f32.xlu0 %v1937
    %v1965 = vpop.xlane.xlu0 %1964
    %1966 = vmax.xlane.f32.xlu0 %v1938
    %v1967 = vpop.xlane.xlu0 %1966
    %1968 = vmax.xlane.f32.xlu0 %v1939
    %v1969 = vpop.xlane.xlu0 %1968
    %1970 = vmax.xlane.f32.xlu0 %v1940
    %v1971 = vpop.xlane.xlu0 %1970
    %1972 = vmax.xlane.f32.xlu0 %v1941
    %v1973 = vpop.xlane.xlu0 %1972
    %v1974 = vsub.f32 %v1926, %v1943
    %v1975 = vsub.f32 %v1927, %v1945
    %v1976 = vsub.f32 %v1928, %v1947
    %v1977 = vsub.f32 %v1929, %v1949
    %v1978 = vsub.f32 %v1930, %v1951
    %v1979 = vsub.f32 %v1931, %v1953
    %v1980 = vsub.f32 %v1932, %v1955
    %v1981 = vsub.f32 %v1933, %v1957
    %v1982 = vsub.f32 %v1934, %v1959
    %v1983 = vsub.f32 %v1935, %v1961
    %v1984 = vsub.f32 %v1936, %v1963
    %v1985 = vsub.f32 %v1937, %v1965
    %v1986 = vsub.f32 %v1938, %v1967
    %v1987 = vsub.f32 %v1939, %v1969
    %v1988 = vsub.f32 %v1940, %v1971
    %v1989 = vsub.f32 %v1941, %v1973
    %v1990 = vmul.f32 %v1974, 1.442695
    %v1991 = vpow.pop %v1990
    %v1992 = vmul.f32 %v1975, 1.442695
    %v1993 = vpow.pop %v1992
    %v1994 = vmul.f32 %v1976, 1.442695
    %v1995 = vpow.pop %v1994
    %v1996 = vmul.f32 %v1977, 1.442695
    %v1997 = vpow.pop %v1996
    %v1998 = vmul.f32 %v1978, 1.442695
    %v1999 = vpow.pop %v1998
    %v2000 = vmul.f32 %v1979, 1.442695
    %v2001 = vpow.pop %v2000
    %v2002 = vmul.f32 %v1980, 1.442695
    %v2003 = vpow.pop %v2002
    %v2004 = vmul.f32 %v1981, 1.442695
    %v2005 = vpow.pop %v2004
    %v2006 = vmul.f32 %v1982, 1.442695
    %v2007 = vpow.pop %v2006
    %v2008 = vmul.f32 %v1983, 1.442695
    %v2009 = vpow.pop %v2008
    %v2010 = vmul.f32 %v1984, 1.442695
    %v2011 = vpow.pop %v2010
    %v2012 = vmul.f32 %v1985, 1.442695
    %v2013 = vpow.pop %v2012
    %v2014 = vmul.f32 %v1986, 1.442695
    %v2015 = vpow.pop %v2014
    %v2016 = vmul.f32 %v1987, 1.442695
    %v2017 = vpow.pop %v2016
    %v2018 = vmul.f32 %v1988, 1.442695
    %v2019 = vpow.pop %v2018
    %v2020 = vmul.f32 %v1989, 1.442695
    %v2021 = vpow.pop %v2020
    %2022 = vadd.xlane.f32.xlu0 %v1991
    %v2023 = vpop.xlane.xlu0 %2022
    %2024 = vadd.xlane.f32.xlu0 %v1993
    %v2025 = vpop.xlane.xlu0 %2024
    %2026 = vadd.xlane.f32.xlu0 %v1995
    %v2027 = vpop.xlane.xlu0 %2026
    %2028 = vadd.xlane.f32.xlu0 %v1997
    %v2029 = vpop.xlane.xlu0 %2028
    %2030 = vadd.xlane.f32.xlu0 %v1999
    %v2031 = vpop.xlane.xlu0 %2030
    %2032 = vadd.xlane.f32.xlu0 %v2001
    %v2033 = vpop.xlane.xlu0 %2032
    %2034 = vadd.xlane.f32.xlu0 %v2003
    %v2035 = vpop.xlane.xlu0 %2034
    %2036 = vadd.xlane.f32.xlu0 %v2005
    %v2037 = vpop.xlane.xlu0 %2036
    %2038 = vadd.xlane.f32.xlu0 %v2007
    %v2039 = vpop.xlane.xlu0 %2038
    %2040 = vadd.xlane.f32.xlu0 %v2009
    %v2041 = vpop.xlane.xlu0 %2040
    %2042 = vadd.xlane.f32.xlu0 %v2011
    %v2043 = vpop.xlane.xlu0 %2042
    %2044 = vadd.xlane.f32.xlu0 %v2013
    %v2045 = vpop.xlane.xlu0 %2044
    %2046 = vadd.xlane.f32.xlu0 %v2015
    %v2047 = vpop.xlane.xlu0 %2046
    %2048 = vadd.xlane.f32.xlu0 %v2017
    %v2049 = vpop.xlane.xlu0 %2048
    %2050 = vadd.xlane.f32.xlu0 %v2019
    %v2051 = vpop.xlane.xlu0 %2050
    %2052 = vadd.xlane.f32.xlu0 %v2021
    %v2053 = vpop.xlane.xlu0 %2052
    %v2054 = vlog2.pop %v2023
    %v2055 = vmul.f32 %v2054, 0.6931472
    %v2056 = vlog2.pop %v2025
    %v2057 = vmul.f32 %v2056, 0.6931472
    %v2058 = vlog2.pop %v2027
    %v2059 = vmul.f32 %v2058, 0.6931472
    %v2060 = vlog2.pop %v2029
    %v2061 = vmul.f32 %v2060, 0.6931472
    %v2062 = vlog2.pop %v2031
    %v2063 = vmul.f32 %v2062, 0.6931472
    %v2064 = vlog2.pop %v2033
    %v2065 = vmul.f32 %v2064, 0.6931472
    %v2066 = vlog2.pop %v2035
    %v2067 = vmul.f32 %v2066, 0.6931472
    %v2068 = vlog2.pop %v2037
    %v2069 = vmul.f32 %v2068, 0.6931472
    %v2070 = vlog2.pop %v2039
    %v2071 = vmul.f32 %v2070, 0.6931472
    %v2072 = vlog2.pop %v2041
    %v2073 = vmul.f32 %v2072, 0.6931472
    %v2074 = vlog2.pop %v2043
    %v2075 = vmul.f32 %v2074, 0.6931472
    %v2076 = vlog2.pop %v2045
    %v2077 = vmul.f32 %v2076, 0.6931472
    %v2078 = vlog2.pop %v2047
    %v2079 = vmul.f32 %v2078, 0.6931472
    %v2080 = vlog2.pop %v2049
    %v2081 = vmul.f32 %v2080, 0.6931472
    %v2082 = vlog2.pop %v2051
    %v2083 = vmul.f32 %v2082, 0.6931472
    %v2084 = vlog2.pop %v2053
    %v2085 = vmul.f32 %v2084, 0.6931472
    %v2086 = vsub.f32 %v1974, %v2055
    %v2087 = vsub.f32 %v1975, %v2057
    %v2088 = vsub.f32 %v1976, %v2059
    %v2089 = vsub.f32 %v1977, %v2061
    %v2090 = vsub.f32 %v1978, %v2063
    %v2091 = vsub.f32 %v1979, %v2065
    %v2092 = vsub.f32 %v1980, %v2067
    %v2093 = vsub.f32 %v1981, %v2069
    %v2094 = vsub.f32 %v1982, %v2071
    %v2095 = vsub.f32 %v1983, %v2073
    %v2096 = vsub.f32 %v1984, %v2075
    %v2097 = vsub.f32 %v1985, %v2077
    %v2098 = vsub.f32 %v1986, %v2079
    %v2099 = vsub.f32 %v1987, %v2081
    %v2100 = vsub.f32 %v1988, %v2083
    %v2101 = vsub.f32 %v1989, %v2085
    %2102 = vst [vmem:[#allocation12] sm:$0xff] %v2086
    %2103 = vst [vmem:[#allocation12 + $0x8] sm:$0xff] %v2087
    %2104 = vst [vmem:[#allocation12 + $0x10] sm:$0xff] %v2088
    %2105 = vst [vmem:[#allocation12 + $0x18] sm:$0xff] %v2089
    %2106 = vst [vmem:[#allocation12 + $0x20] sm:$0xff] %v2090
    %2107 = vst [vmem:[#allocation12 + $0x28] sm:$0xff] %v2091
    %2108 = vst [vmem:[#allocation12 + $0x30] sm:$0xff] %v2092
    %2109 = vst [vmem:[#allocation12 + $0x38] sm:$0xff] %v2093
    %2110 = vst [vmem:[#allocation12 + $0x40] sm:$0xff] %v2094
    %2111 = vst [vmem:[#allocation12 + $0x48] sm:$0xff] %v2095
    %2112 = vst [vmem:[#allocation12 + $0x50] sm:$0xff] %v2096
    %2113 = vst [vmem:[#allocation12 + $0x58] sm:$0xff] %v2097
    %2114 = vst [vmem:[#allocation12 + $0x60] sm:$0xff] %v2098
    %2115 = vst [vmem:[#allocation12 + $0x68] sm:$0xff] %v2099
    %2116 = vst [vmem:[#allocation12 + $0x70] sm:$0xff] %v2100
    %2117 = vst [vmem:[#allocation12 + $0x78] sm:$0xff] %v2101
    // Predicated region
    $region46: #{tpu_custom_call.1} parent=1 // pred_check
      _
    $region47: #{tpu_custom_call.1} parent=1 // pred_check_branch
      %2119 = sbr.rel (0) target = $region49
    $region48: #{tpu_custom_call.1} parent=1 // pred_region
      %s2121 = ssub.s32 2048, 2048
      %2122 = vsyncadd [#allocation5], %s2121
      %s2123 = sshll.u32 [#allocation12], 4
      %s2124 = int_to_ptr.vmem [resolvable:$true] %s2123
      %2129 = dma.vmem_to_hbm [thread:$0]  %s2124, 2048, %s5, [#allocation5], 128, 128, 8
    $region49: #{tpu_custom_call.1} parent=1 // pred_fallthru
      _
    // Predicated region
    $region50: #{tpu_custom_call.1} parent=1 // pred_check
      _
    $region51: #{tpu_custom_call.1} parent=1 // pred_check_branch
      %2131 = sbr.rel (0) target = $region53
    $region52: #{tpu_custom_call.1} parent=1 // pred_region
      %2132 = dma.done [#allocation5], 2048
    $region53: #{tpu_custom_call.1} parent=1 // pred_fallthru
      _
    %2133 = vsyncpa [#allocation4], 1
    %2134 = vsyncpa [#allocation7], 1
    %2135 = vsyncpa [#allocation10], 1
    %2136 = vsyncpa [#allocation5], 1

</llo_original>
